<compile_context>
chip_gen: v7x
topology: tpu7x:2x2x1
jax: 0.10.0
libtpu: 0.0.40
codegen_flags: <defaults>
</compile_context>

<pallas_src>
import functools

import jax
import jax.numpy as jnp
from jax import lax
from jax.experimental import pallas as pl
from jax.experimental.pallas import tpu as pltpu

LANE = 128


def _round_up(x, m):
    return (x + m - 1) // m * m


def _num_tensorcores_per_chip():
    """Best-effort detection of 2-TC (megacore-style) chips; safe fallback = 1 (no split)."""
    try:
        info = pltpu.get_tpu_info()
        for name in ("num_cores", "core_count", "num_tensorcores", "tensorcores_per_chip"):
            v = getattr(info, name, None)
            if v:
                return int(v)
    except Exception:
        pass
    try:
        kind = jax.devices()[0].device_kind.lower()
    except Exception:
        return 1
    return 2 if any(tag in kind for tag in ("v4", "v5p", "v7", "7x")) else 1


# ---------------- encoder: conv3x3 + ReLU + height-mean + proj + xEmbed (one kernel) ----------------

def _encoder_kernel(xp_ref, wconv_ref, bconv_ref, wproj_ref, bproj_ref,
                    wx_ref, bxs_ref, feats_ref, xproj_ref):
    # xp_ref: (1, H+2, W+2, Cin) zero-padded NHWC image block (one batch element).
    Hp2, Wp2, Cin = xp_ref.shape[1], xp_ref.shape[2], xp_ref.shape[3]
    H, W = Hp2 - 2, Wp2 - 2
    C1 = wconv_ref.shape[1]
    D = wproj_ref.shape[1]
    x = xp_ref[...][0]                                            # (H+2, W+2, Cin) f32

    # im2col in VMEM: one (H*W, 9*Cin) tile -> single bf16 MXU dot (instead of 9 K=Cin dots).
    patches = []
    for dh in range(3):
        for dw in range(3):
            patches.append(x[dh:dh + H, dw:dw + W, :].reshape(H * W, Cin))
    xcol = jnp.concatenate(patches, axis=-1).astype(jnp.bfloat16)  # (H*W, 9*Cin)

    conv = jnp.dot(xcol, wconv_ref[...], preferred_element_type=jnp.float32) + bconv_ref[...]
    conv = jnp.maximum(conv, 0.0)                                  # conv + bias + ReLU
    pooled = jnp.mean(conv.reshape(H, W, C1), axis=0)              # height-mean -> (W, C1) f32

    # BiLSTM-stand-in projection, emitted directly in bf16 (no f32 HBM round trip).
    feats = (jnp.dot(pooled.astype(jnp.bfloat16), wproj_ref[...],
                     preferred_element_type=jnp.float32) + bproj_ref[...])       # (W, D)
    feats_bf = feats.astype(jnp.bfloat16)
    # Attention xEmbed projection, with (att_bx + att_bs) pre-folded into the bias.
    xproj = (jnp.dot(feats_bf, wx_ref[...],
                     preferred_element_type=jnp.float32) + bxs_ref[...])          # (W, A)

    feats_ref[...] = feats_bf.reshape(1, W, D)
    xproj_ref[...] = xproj.astype(jnp.bfloat16).reshape(1, W, xproj.shape[-1])


def pallas_encoder(xp, params):
    B, Hp2, Wp2, Cin = xp.shape
    W = Wp2 - 2
    K9 = params["conv_w"].shape[0]
    C1 = params["conv_w"].shape[1]
    D = params["proj_w"].shape[1]
    A = params["att_wx"].shape[1]
    wconst = lambda bi: (0, 0)
    return pl.pallas_call(
        _encoder_kernel,
        out_shape=(jax.ShapeDtypeStruct((B, W, D), jnp.bfloat16),
                   jax.ShapeDtypeStruct((B, W, A), jnp.bfloat16)),
        grid=(B,),
        in_specs=[pl.BlockSpec((1, Hp2, Wp2, Cin), lambda bi: (bi, 0, 0, 0)),
                  pl.BlockSpec((K9, C1), wconst),
                  pl.BlockSpec((1, C1), wconst),
                  pl.BlockSpec((C1, D), wconst),
                  pl.BlockSpec((1, D), wconst),
                  pl.BlockSpec((D, A), wconst),
                  pl.BlockSpec((1, A), wconst)],
        out_specs=(pl.BlockSpec((1, W, D), lambda bi: (bi, 0, 0)),
                   pl.BlockSpec((1, W, A), lambda bi: (bi, 0, 0))),
        compiler_params=pltpu.CompilerParams(dimension_semantics=("parallel",)),
    )(xp, params["conv_w"], params["conv_b"], params["proj_w"], params["proj_b"],
      params["att_wx"], params["att_bxs"])


# ------------- fused teacher-forced attention decoder + SequenceCrossEntropyLoss -------------

def _decoder_ce_kernel(yemb_ref, feats_ref, xproj_ref, tgt_ref, len_ref,
                       ws_ref, wv_ref, wie_ref, wid_ref, bi_ref, wh_ref, bh_ref,
                       wfc_ref, bfc_ref, loss_ref, *, n_valid, batch_total):
    tb, T, D = feats_ref.shape
    S = wh_ref.shape[0]
    C = wfc_ref.shape[1]
    L = yemb_ref.shape[0]

    # Loop-invariant values (small; all weight blocks are VMEM-resident refs read in the body).
    feats_f32 = feats_ref[...].astype(jnp.float32)                 # (tb, T, D)
    xproj = xproj_ref[...].astype(jnp.float32)                     # (tb, T, A); (bx+bs) pre-folded
    lens = len_ref[...]                                            # (tb, 1) int32
    cls = lax.broadcasted_iota(jnp.int32, (tb, C), 1)

    def step(l, carry):
        h, loss_vec = carry                                        # (tb,S) f32, (tb,1) f32
        h_bf = h.astype(jnp.bfloat16)
        yemb = yemb_ref[l]                                         # (tb, E) bf16 (resident)
        tgt = tgt_ref[l]                                           # (tb, 1) int32

        # --- Bahdanau attention (ASTER AttentionUnit); vEmbed bias dropped (softmax-invariant) ---
        sproj = jnp.dot(h_bf, ws_ref[...], preferred_element_type=jnp.float32)   # (tb, A)
        att = jnp.tanh(xproj + sproj[:, None, :]) * wv_ref[...]                  # (tb, T, A)
        e = jnp.sum(att, axis=-1, keepdims=True)                                 # (tb, T, 1)
        e = e - jnp.max(e, axis=1, keepdims=True)
        p = jnp.exp(e)
        alpha = p * pl.reciprocal(jnp.sum(p, axis=1, keepdims=True), approx=True)
        # Context as a VPU weighted sum over T (an M=1 batched MXU matmul would waste the MXU).
        ctx = jnp.sum(alpha * feats_f32, axis=1)                                  # (tb, D) f32

        # --- fused GRU cell (PyTorch GRUCell equations); input = [yemb ; ctx] via two dots ---
        gi = (jnp.dot(yemb, wie_ref[...], preferred_element_type=jnp.float32)
              + jnp.dot(ctx.astype(jnp.bfloat16), wid_ref[...],
                        preferred_element_type=jnp.float32)
              + bi_ref[...])
        gh = jnp.dot(h_bf, wh_ref[...], preferred_element_type=jnp.float32) + bh_ref[...]
        r = jax.nn.sigmoid(gi[:, 0:S] + gh[:, 0:S])
        z = jax.nn.sigmoid(gi[:, S:2 * S] + gh[:, S:2 * S])
        n = jnp.tanh(gi[:, 2 * S:3 * S] + r * gh[:, 2 * S:3 * S])
        h_new = (1.0 - z) * n + z * h

        # --- classifier + fused SequenceCrossEntropyLoss step (no logits HBM round-trip) ---
        logits = (jnp.dot(h_new.astype(jnp.bfloat16), wfc_ref[...],
                          preferred_element_type=jnp.float32) + bfc_ref[...])      # (tb, C)
        logits = jnp.where(cls < n_valid, logits, -1e30)            # mask padded class columns
        m = jnp.max(logits, axis=-1, keepdims=True)
        lse = m + jnp.log(jnp.sum(jnp.exp(logits - m), axis=-1, keepdims=True))
        picked = jnp.sum((logits - lse) * (cls == tgt).astype(jnp.float32),
                         axis=-1, keepdims=True)                    # (tb, 1)
        mask = (l < lens).astype(jnp.float32)                       # (tb, 1)
        return h_new, loss_vec - picked * mask

    h0 = jnp.zeros((tb, S), jnp.float32)
    l0 = jnp.zeros((tb, 1), jnp.float32)
    _, loss_vec = lax.fori_loop(0, L, step, (h0, l0))

    # ASTER SequenceCrossEntropyLoss: masked token sum / batch_size (summed across batch blocks
    # in the wrapper).
    block_loss = jnp.sum(loss_vec, axis=0, keepdims=True) * (1.0 / batch_total)   # (1, 1)
    loss_ref[...] = jnp.broadcast_to(block_loss, loss_ref.shape)


def fused_decoder_ce(params, feats, xproj, yemb_all, tgt, lens, *, n_valid):
    B, T, D = feats.shape
    A = xproj.shape[2]
    L, _, E = yemb_all.shape
    S = params["gru_wh"].shape[0]
    C = params["wfc"].shape[1]

    # Batch/megacore split only when the chip actually has 2 TensorCores (e.g. v7x) and the
    # halves stay 8-row aligned; single-TC v5e/v6e keep one resident batch block.
    tb = B
    if _num_tensorcores_per_chip() >= 2 and B % 16 == 0:
        tb = B // 2
    nb = B // tb
    wconst = lambda ib: (0, 0)

    out = pl.pallas_call(
        functools.partial(_decoder_ce_kernel, n_valid=n_valid, batch_total=B),
        out_shape=jax.ShapeDtypeStruct((nb * 8, 128), jnp.float32),
        grid=(nb,),
        in_specs=[
            pl.BlockSpec((L, tb, E), lambda ib: (0, ib, 0)),   # teacher-forcing embeddings (resident)
            pl.BlockSpec((tb, T, D), lambda ib: (ib, 0, 0)),   # feats bf16 (resident)
            pl.BlockSpec((tb, T, A), lambda ib: (ib, 0, 0)),   # xproj bf16 (resident, biases folded)
            pl.BlockSpec((L, tb, 1), lambda ib: (0, ib, 0)),   # targets
            pl.BlockSpec((tb, 1), lambda ib: (ib, 0)),         # lengths
            pl.BlockSpec((S, A), wconst),                      # att_ws
            pl.BlockSpec((1, A), wconst),                      # att_wv
            pl.BlockSpec((E, 3 * S), wconst),                  # gru_wi (yemb half)
            pl.BlockSpec((D, 3 * S), wconst),                  # gru_wi (context half)
            pl.BlockSpec((1, 3 * S), wconst),                  # gru_bi
            pl.BlockSpec((S, 3 * S), wconst),                  # gru_wh
            pl.BlockSpec((1, 3 * S), wconst),                  # gru_bh
            pl.BlockSpec((S, C), wconst),                      # wfc
            pl.BlockSpec((1, C), wconst),                      # bfc
        ],
        out_specs=pl.BlockSpec((8, 128), lambda ib: (ib, 0)),
        compiler_params=pltpu.CompilerParams(
            dimension_semantics=("parallel",),
            vmem_limit_bytes=48 * 1024 * 1024),
    )(yemb_all, feats, xproj, tgt, lens,
      params["att_ws"], params["att_wv"],
      params["gru_wi_e"], params["gru_wi_d"], params["gru_bi"],
      params["gru_wh"], params["gru_bh"],
      params["wfc"], params["bfc"])
    # One partial loss per batch block, replicated over its (8,128) output block.
    return jnp.sum(out[::8, 0]).reshape(1)


# ----------------------------- parameters (zero-padded to 128) -----------------------------

def _padded_normal(key, logical_shape, padded_shape, scale=0.1):
    w = jnp.zeros(padded_shape, jnp.float32)
    v = (scale * jax.random.normal(key, logical_shape)).astype(jnp.float32)
    return w.at[tuple(slice(0, s) for s in logical_shape)].set(v)


def init_params(key, *, cin=3, c1=32, d=32, s_dim=32, att_dim=32, emb_dim=32, n_cls=16):
    # Feature dims zero-padded to multiples of 128 (lane-dense matmuls/stores); padding is exact
    # zeros so the logical (unpadded) model is unchanged.  Matmul weights stored bf16 once here.
    C1, D, S, A, E = (_round_up(v, LANE) for v in (c1, d, s_dim, att_dim, emb_dim))
    C = _round_up(n_cls, LANE)
    ks = jax.random.split(key, 8)
    f32, bf16 = jnp.float32, jnp.bfloat16
    z = lambda *shape: jnp.zeros(shape, f32)
    p = {}
    # encoder (stand-in for ResNet_ASTER + BiLSTM): 3x3 conv in im2col row order (dh,dw,cin)
    p["conv_w"] = _padded_normal(ks[0], (9 * cin, c1), (9 * cin, C1)).astype(bf16)
    p["conv_b"] = z(1, C1)
    p["proj_w"] = _padded_normal(ks[1], (c1, d), (C1, D)).astype(bf16)
    p["proj_b"] = z(1, D)
    # attention unit; xEmbed bias + sEmbed bias folded into one bias added to xproj
    p["att_wx"] = _padded_normal(ks[2], (d, att_dim), (D, A)).astype(bf16)
    p["att_bxs"] = z(1, A)
    p["att_ws"] = _padded_normal(ks[3], (s_dim, att_dim), (S, A)).astype(bf16)
    p["att_wv"] = _padded_normal(ks[4], (1, att_dim), (1, A))      # f32; vEmbed bias dropped
    # target embedding (row n_cls = SOS token)
    p["emb"] = _padded_normal(ks[5], (n_cls + 1, emb_dim), (n_cls + 1, E)).astype(bf16)
    # GRU: input weights split into yemb / context halves (no per-step concat); gates [r | z | n]
    wie = jnp.zeros((E, 3 * S), f32)
    wid = jnp.zeros((D, 3 * S), f32)
    wh = jnp.zeros((S, 3 * S), f32)
    kk = jax.random.split(ks[6], 9)
    for g in range(3):
        wie = wie.at[0:emb_dim, g * S:g * S + s_dim].set(
            0.1 * jax.random.normal(kk[3 * g + 0], (emb_dim, s_dim)))
        wid = wid.at[0:d, g * S:g * S + s_dim].set(
            0.1 * jax.random.normal(kk[3 * g + 1], (d, s_dim)))
        wh = wh.at[0:s_dim, g * S:g * S + s_dim].set(
            0.1 * jax.random.normal(kk[3 * g + 2], (s_dim, s_dim)))
    p["gru_wi_e"] = wie.astype(bf16)
    p["gru_wi_d"] = wid.astype(bf16)
    p["gru_bi"] = z(1, 3 * S)
    p["gru_wh"] = wh.astype(bf16)
    p["gru_bh"] = z(1, 3 * S)
    # classifier
    p["wfc"] = _padded_normal(ks[7], (s_dim, n_cls), (S, C)).astype(bf16)
    p["bfc"] = z(1, C)
    return p


# ----------------------------- forward (training mode) -----------------------------

def model_forward(params, images_nchw, rec_targets, rec_lengths, *, max_len, n_cls):
    # TODO(synk): STN_ON branch (F.interpolate + STNHead + TPSSpatialTransformer1) is skipped;
    # ModelBuilder default STN_ON=False.
    B, Cin, H, W = images_nchw.shape
    del max_len  # decode length is taken from rec_targets' second dim
    # NCHW -> NHWC + 1-pixel zero halo (two cheap copy ops that XLA fuses; halo handled here so
    # the conv kernel can read a rectangular block).
    x = jnp.transpose(images_nchw, (0, 2, 3, 1)).astype(jnp.float32)
    xp = jnp.pad(x, ((0, 0), (1, 1), (1, 1), (0, 0)))

    # ---- encoder: one fused kernel -> feats (B, T, D) bf16 and xproj (B, T, A) bf16 ----
    # TODO(synk): ResNet_ASTER residual block stack + 2-layer BiLSTM reduced to
    # conv + height-pool + linear projection (same (B, T, out_planes) contract).
    feats, xproj = pallas_encoder(xp, params)

    # ---- teacher-forcing embeddings gathered once (SOS token = index n_cls) ----
    sos = jnp.full((B, 1), n_cls, jnp.int32)
    prev = jnp.concatenate([sos, rec_targets[:, :-1].astype(jnp.int32)], axis=1)   # (B, L)
    yemb_all = jnp.take(params["emb"], prev.T, axis=0)                             # (L, B, E) bf16

    tgt = jnp.transpose(rec_targets.astype(jnp.int32), (1, 0))[:, :, None]         # (L, B, 1)
    lens = rec_lengths.astype(jnp.int32)[:, None]                                  # (B, 1)

    # ---- fused attention decoder (AttentionRecognitionHead, teacher forcing) + CE loss ----
    loss_rec = fused_decoder_ce(params, feats, xproj, yemb_all, tgt, lens, n_valid=n_cls)

    # TODO(synk): eval-mode beam_search / greedy_sample paths of the decoder are not implemented.
    return {"losses": {"loss_rec": loss_rec}, "output": {}}


# ----------------------------- demo -----------------------------

if __name__ == "__main__":
    key = jax.random.PRNGKey(0)
    kp, kx, kt, kl = jax.random.split(key, 4)

    B, Cin, H, W = 2, 3, 8, 16
    max_len, n_cls = 8, 16

    params = init_params(kp, cin=Cin, n_cls=n_cls)
    images = jax.random.normal(kx, (B, Cin, H, W), jnp.float32)          # NCHW, like PyTorch
    rec_targets = jax.random.randint(kt, (B, max_len), 0, n_cls, jnp.int32)
    rec_lengths = jax.random.randint(kl, (B,), 1, max_len + 1, jnp.int32)

    fwd = jax.jit(functools.partial(model_forward, max_len=max_len, n_cls=n_cls))
    out = fwd(params, images, rec_targets, rec_lengths)
    loss = jax.block_until_ready(out["losses"]["loss_rec"])
    assert loss.shape == (1,) and bool(jnp.isfinite(loss).all())
    print("KERNEL_OK")
</pallas_src>

<mosaic_0001>
module attributes {stable_mosaic.version = 11 : i64} {
  func.func @_encoder_kernel(%arg0: i32, %arg1: memref<1x10x18x3xf32, #tpu.memory_space<vmem>>, %arg2: memref<27x128xbf16, #tpu.memory_space<vmem>>, %arg3: memref<1x128xf32, #tpu.memory_space<vmem>>, %arg4: memref<128x128xbf16, #tpu.memory_space<vmem>>, %arg5: memref<1x128xf32, #tpu.memory_space<vmem>>, %arg6: memref<128x128xbf16, #tpu.memory_space<vmem>>, %arg7: memref<1x128xf32, #tpu.memory_space<vmem>>, %arg8: memref<1x16x128xbf16, #tpu.memory_space<vmem>>, %arg9: memref<1x16x128xbf16, #tpu.memory_space<vmem>>) attributes {dimension_semantics = [#tpu.dimension_semantics<parallel>], iteration_bounds = array<i64: 2>, scalar_prefetch = 0 : i64, scratch_operands = 0 : i64, tpu.core_type = #tpu.core_type<tc>, window_params = [{transform_indices = @transform_0, window_bounds = array<i64: 1, 10, 18, 3>}, {pipeline_mode = #tpu.pipeline_mode<synchronous>, transform_indices = @transform_1, window_bounds = array<i64: 27, 128>}, {pipeline_mode = #tpu.pipeline_mode<synchronous>, transform_indices = @transform_2, window_bounds = array<i64: 1, 128>}, {pipeline_mode = #tpu.pipeline_mode<synchronous>, transform_indices = @transform_3, window_bounds = array<i64: 128, 128>}, {pipeline_mode = #tpu.pipeline_mode<synchronous>, transform_indices = @transform_4, window_bounds = array<i64: 1, 128>}, {pipeline_mode = #tpu.pipeline_mode<synchronous>, transform_indices = @transform_5, window_bounds = array<i64: 128, 128>}, {pipeline_mode = #tpu.pipeline_mode<synchronous>, transform_indices = @transform_6, window_bounds = array<i64: 1, 128>}, {transform_indices = @transform_7, window_bounds = array<i64: 1, 16, 128>}, {transform_indices = @transform_8, window_bounds = array<i64: 1, 16, 128>}]} {
    %c0 = arith.constant 0 : index
    %c0_0 = arith.constant 0 : index
    %c0_1 = arith.constant 0 : index
    %c0_2 = arith.constant 0 : index
    %0 = vector.load %arg1[%c0, %c0_0, %c0_1, %c0_2] : memref<1x10x18x3xf32, #tpu.memory_space<vmem>>, vector<1x10x18x3xf32>
    %1 = vector.shape_cast %0 : vector<1x10x18x3xf32> to vector<10x18x3xf32>
    %2 = vector.extract_strided_slice %1 {offsets = [0, 0, 0], sizes = [8, 16, 3], strides = [1, 1, 1]} : vector<10x18x3xf32> to vector<8x16x3xf32>
    %3 = vector.shape_cast %2 : vector<8x16x3xf32> to vector<128x3xf32>
    %4 = vector.extract_strided_slice %1 {offsets = [0, 1, 0], sizes = [8, 16, 3], strides = [1, 1, 1]} : vector<10x18x3xf32> to vector<8x16x3xf32>
    %5 = vector.shape_cast %4 : vector<8x16x3xf32> to vector<128x3xf32>
    %6 = vector.extract_strided_slice %1 {offsets = [0, 2, 0], sizes = [8, 16, 3], strides = [1, 1, 1]} : vector<10x18x3xf32> to vector<8x16x3xf32>
    %7 = vector.shape_cast %6 : vector<8x16x3xf32> to vector<128x3xf32>
    %8 = vector.extract_strided_slice %1 {offsets = [1, 0, 0], sizes = [8, 16, 3], strides = [1, 1, 1]} : vector<10x18x3xf32> to vector<8x16x3xf32>
    %9 = vector.shape_cast %8 : vector<8x16x3xf32> to vector<128x3xf32>
    %10 = vector.extract_strided_slice %1 {offsets = [1, 1, 0], sizes = [8, 16, 3], strides = [1, 1, 1]} : vector<10x18x3xf32> to vector<8x16x3xf32>
    %11 = vector.shape_cast %10 : vector<8x16x3xf32> to vector<128x3xf32>
    %12 = vector.extract_strided_slice %1 {offsets = [1, 2, 0], sizes = [8, 16, 3], strides = [1, 1, 1]} : vector<10x18x3xf32> to vector<8x16x3xf32>
    %13 = vector.shape_cast %12 : vector<8x16x3xf32> to vector<128x3xf32>
    %14 = vector.extract_strided_slice %1 {offsets = [2, 0, 0], sizes = [8, 16, 3], strides = [1, 1, 1]} : vector<10x18x3xf32> to vector<8x16x3xf32>
    %15 = vector.shape_cast %14 : vector<8x16x3xf32> to vector<128x3xf32>
    %16 = vector.extract_strided_slice %1 {offsets = [2, 1, 0], sizes = [8, 16, 3], strides = [1, 1, 1]} : vector<10x18x3xf32> to vector<8x16x3xf32>
    %17 = vector.shape_cast %16 : vector<8x16x3xf32> to vector<128x3xf32>
    %18 = vector.extract_strided_slice %1 {offsets = [2, 2, 0], sizes = [8, 16, 3], strides = [1, 1, 1]} : vector<10x18x3xf32> to vector<8x16x3xf32>
    %19 = vector.shape_cast %18 : vector<8x16x3xf32> to vector<128x3xf32>
    %20 = tpu.concatenate %3, %5, %7, %9, %11, %13, %15, %17, %19 in 1 : vector<128x3xf32>, vector<128x3xf32>, vector<128x3xf32>, vector<128x3xf32>, vector<128x3xf32>, vector<128x3xf32>, vector<128x3xf32>, vector<128x3xf32>, vector<128x3xf32> -> vector<128x27xf32>
    %21 = arith.truncf %20 : vector<128x27xf32> to vector<128x27xbf16>
    %c0_3 = arith.constant 0 : index
    %c0_4 = arith.constant 0 : index
    %22 = vector.load %arg2[%c0_3, %c0_4] : memref<27x128xbf16, #tpu.memory_space<vmem>>, vector<27x128xbf16>
    %cst = arith.constant dense<0.000000e+00> : vector<128x128xf32>
    %23 = tpu.matmul %21, %22, %cst {dimension_numbers = #tpu.dot_dimension_numbers<[1], [0], [0], [1], [0, 0, 1, 1], [], []>} : vector<128x27xbf16>, vector<27x128xbf16>, vector<128x128xf32> -> vector<128x128xf32>
    %c0_5 = arith.constant 0 : index
    %c0_6 = arith.constant 0 : index
    %24 = vector.load %arg3[%c0_5, %c0_6] : memref<1x128xf32, #tpu.memory_space<vmem>>, vector<1x128xf32>
    %25 = vector.broadcast %24 : vector<1x128xf32> to vector<128x128xf32>
    %26 = arith.addf %23, %25 : vector<128x128xf32>
    %cst_7 = arith.constant 0.000000e+00 : f32
    %27 = vector.broadcast %cst_7 : f32 to vector<128x128xf32>
    %28 = arith.maximumf %26, %27 : vector<128x128xf32>
    %29 = vector.shape_cast %28 : vector<128x128xf32> to vector<8x16x128xf32>
    %cst_8 = arith.constant dense<0.000000e+00> : vector<16x128xf32>
    %30 = vector.multi_reduction <add>, %29, %cst_8 [0] : vector<8x16x128xf32> to vector<16x128xf32>
    %cst_9 = arith.constant 8.000000e+00 : f32
    %31 = vector.broadcast %cst_9 : f32 to vector<16x128xf32>
    %32 = arith.divf %30, %31 : vector<16x128xf32>
    %33 = arith.truncf %32 : vector<16x128xf32> to vector<16x128xbf16>
    %c0_10 = arith.constant 0 : index
    %c0_11 = arith.constant 0 : index
    %34 = vector.load %arg4[%c0_10, %c0_11] : memref<128x128xbf16, #tpu.memory_space<vmem>>, vector<128x128xbf16>
    %cst_12 = arith.constant dense<0.000000e+00> : vector<16x128xf32>
    %35 = tpu.matmul %33, %34, %cst_12 {dimension_numbers = #tpu.dot_dimension_numbers<[1], [0], [0], [1], [0, 0, 1, 1], [], []>} : vector<16x128xbf16>, vector<128x128xbf16>, vector<16x128xf32> -> vector<16x128xf32>
    %c0_13 = arith.constant 0 : index
    %c0_14 = arith.constant 0 : index
    %36 = vector.load %arg5[%c0_13, %c0_14] : memref<1x128xf32, #tpu.memory_space<vmem>>, vector<1x128xf32>
    %37 = vector.broadcast %36 : vector<1x128xf32> to vector<16x128xf32>
    %38 = arith.addf %35, %37 : vector<16x128xf32>
    %39 = arith.truncf %38 : vector<16x128xf32> to vector<16x128xbf16>
    %c0_15 = arith.constant 0 : index
    %c0_16 = arith.constant 0 : index
    %40 = vector.load %arg6[%c0_15, %c0_16] : memref<128x128xbf16, #tpu.memory_space<vmem>>, vector<128x128xbf16>
    %cst_17 = arith.constant dense<0.000000e+00> : vector<16x128xf32>
    %41 = tpu.matmul %39, %40, %cst_17 {dimension_numbers = #tpu.dot_dimension_numbers<[1], [0], [0], [1], [0, 0, 1, 1], [], []>} : vector<16x128xbf16>, vector<128x128xbf16>, vector<16x128xf32> -> vector<16x128xf32>
    %c0_18 = arith.constant 0 : index
    %c0_19 = arith.constant 0 : index
    %42 = vector.load %arg7[%c0_18, %c0_19] : memref<1x128xf32, #tpu.memory_space<vmem>>, vector<1x128xf32>
    %43 = vector.broadcast %42 : vector<1x128xf32> to vector<16x128xf32>
    %44 = arith.addf %41, %43 : vector<16x128xf32>
    %45 = vector.shape_cast %39 : vector<16x128xbf16> to vector<1x16x128xbf16>
    %c0_20 = arith.constant 0 : index
    %c0_21 = arith.constant 0 : index
    %c0_22 = arith.constant 0 : index
    %46 = vector.load %arg8[%c0_20, %c0_21, %c0_22] : memref<1x16x128xbf16, #tpu.memory_space<vmem>>, vector<1x16x128xbf16>
    tpu.vector_store %arg8[%c0_20, %c0_21, %c0_22], %45 {strides = array<i32>} : memref<1x16x128xbf16, #tpu.memory_space<vmem>>, vector<1x16x128xbf16>,
    %47 = arith.truncf %44 : vector<16x128xf32> to vector<16x128xbf16>
    %48 = vector.shape_cast %47 : vector<16x128xbf16> to vector<1x16x128xbf16>
    %c0_23 = arith.constant 0 : index
    %c0_24 = arith.constant 0 : index
    %c0_25 = arith.constant 0 : index
    %49 = vector.load %arg9[%c0_23, %c0_24, %c0_25] : memref<1x16x128xbf16, #tpu.memory_space<vmem>>, vector<1x16x128xbf16>
    tpu.vector_store %arg9[%c0_23, %c0_24, %c0_25], %48 {strides = array<i32>} : memref<1x16x128xbf16, #tpu.memory_space<vmem>>, vector<1x16x128xbf16>,
    return
  }
  func.func @transform_0(%arg0: i32) -> (i32, i32, i32, i32) {
    %c0_i32 = arith.constant 0 : i32
    %c0_i32_0 = arith.constant 0 : i32
    %c0_i32_1 = arith.constant 0 : i32
    %c0_i32_2 = arith.constant 0 : i32
    return %arg0, %c0_i32, %c0_i32_0, %c0_i32_1 : i32, i32, i32, i32
  }
  func.func @transform_1(%arg0: i32) -> (i32, i32) {
    %c0_i32 = arith.constant 0 : i32
    %c0_i32_0 = arith.constant 0 : i32
    %c0_i32_1 = arith.constant 0 : i32
    return %c0_i32, %c0_i32_0 : i32, i32
  }
  func.func @transform_2(%arg0: i32) -> (i32, i32) {
    %c0_i32 = arith.constant 0 : i32
    %c0_i32_0 = arith.constant 0 : i32
    %c0_i32_1 = arith.constant 0 : i32
    return %c0_i32, %c0_i32_0 : i32, i32
  }
  func.func @transform_3(%arg0: i32) -> (i32, i32) {
    %c0_i32 = arith.constant 0 : i32
    %c0_i32_0 = arith.constant 0 : i32
    %c0_i32_1 = arith.constant 0 : i32
    return %c0_i32, %c0_i32_0 : i32, i32
  }
  func.func @transform_4(%arg0: i32) -> (i32, i32) {
    %c0_i32 = arith.constant 0 : i32
    %c0_i32_0 = arith.constant 0 : i32
    %c0_i32_1 = arith.constant 0 : i32
    return %c0_i32, %c0_i32_0 : i32, i32
  }
  func.func @transform_5(%arg0: i32) -> (i32, i32) {
    %c0_i32 = arith.constant 0 : i32
    %c0_i32_0 = arith.constant 0 : i32
    %c0_i32_1 = arith.constant 0 : i32
    return %c0_i32, %c0_i32_0 : i32, i32
  }
  func.func @transform_6(%arg0: i32) -> (i32, i32) {
    %c0_i32 = arith.constant 0 : i32
    %c0_i32_0 = arith.constant 0 : i32
    %c0_i32_1 = arith.constant 0 : i32
    return %c0_i32, %c0_i32_0 : i32, i32
  }
  func.func @transform_7(%arg0: i32) -> (i32, i32, i32) {
    %c0_i32 = arith.constant 0 : i32
    %c0_i32_0 = arith.constant 0 : i32
    %c0_i32_1 = arith.constant 0 : i32
    return %arg0, %c0_i32, %c0_i32_0 : i32, i32, i32
  }
  func.func @transform_8(%arg0: i32) -> (i32, i32, i32) {
    %c0_i32 = arith.constant 0 : i32
    %c0_i32_0 = arith.constant 0 : i32
    %c0_i32_1 = arith.constant 0 : i32
    return %arg0, %c0_i32, %c0_i32_0 : i32, i32, i32
  }
}

module attributes {stable_mosaic.version = 11 : i64} {
  func.func @_decoder_ce_kernel(%arg0: i32, %arg1: memref<8x2x128xbf16, #tpu.memory_space<vmem>>, %arg2: memref<2x16x128xbf16, #tpu.memory_space<vmem>>, %arg3: memref<2x16x128xbf16, #tpu.memory_space<vmem>>, %arg4: memref<8x2x1xi32, #tpu.memory_space<vmem>>, %arg5: memref<2x1xi32, #tpu.memory_space<vmem>>, %arg6: memref<128x128xbf16, #tpu.memory_space<vmem>>, %arg7: memref<1x128xf32, #tpu.memory_space<vmem>>, %arg8: memref<128x384xbf16, #tpu.memory_space<vmem>>, %arg9: memref<128x384xbf16, #tpu.memory_space<vmem>>, %arg10: memref<1x384xf32, #tpu.memory_space<vmem>>, %arg11: memref<128x384xbf16, #tpu.memory_space<vmem>>, %arg12: memref<1x384xf32, #tpu.memory_space<vmem>>, %arg13: memref<128x128xbf16, #tpu.memory_space<vmem>>, %arg14: memref<1x128xf32, #tpu.memory_space<vmem>>, %arg15: memref<8x128xf32, #tpu.memory_space<vmem>>) attributes {dimension_semantics = [#tpu.dimension_semantics<parallel>], iteration_bounds = array<i64: 1>, scalar_prefetch = 0 : i64, scratch_operands = 0 : i64, tpu.core_type = #tpu.core_type<tc>, window_params = [{transform_indices = @transform_0, window_bounds = array<i64: 8, 2, 128>}, {transform_indices = @transform_1, window_bounds = array<i64: 2, 16, 128>}, {transform_indices = @transform_2, window_bounds = array<i64: 2, 16, 128>}, {transform_indices = @transform_3, window_bounds = array<i64: 8, 2, 1>}, {transform_indices = @transform_4, window_bounds = array<i64: 2, 1>}, {pipeline_mode = #tpu.pipeline_mode<synchronous>, transform_indices = @transform_5, window_bounds = array<i64: 128, 128>}, {pipeline_mode = #tpu.pipeline_mode<synchronous>, transform_indices = @transform_6, window_bounds = array<i64: 1, 128>}, {pipeline_mode = #tpu.pipeline_mode<synchronous>, transform_indices = @transform_7, window_bounds = array<i64: 128, 384>}, {pipeline_mode = #tpu.pipeline_mode<synchronous>, transform_indices = @transform_8, window_bounds = array<i64: 128, 384>}, {pipeline_mode = #tpu.pipeline_mode<synchronous>, transform_indices = @transform_9, window_bounds = array<i64: 1, 384>}, {pipeline_mode = #tpu.pipeline_mode<synchronous>, transform_indices = @transform_10, window_bounds = array<i64: 128, 384>}, {pipeline_mode = #tpu.pipeline_mode<synchronous>, transform_indices = @transform_11, window_bounds = array<i64: 1, 384>}, {pipeline_mode = #tpu.pipeline_mode<synchronous>, transform_indices = @transform_12, window_bounds = array<i64: 128, 128>}, {pipeline_mode = #tpu.pipeline_mode<synchronous>, transform_indices = @transform_13, window_bounds = array<i64: 1, 128>}, {transform_indices = @transform_14, window_bounds = array<i64: 8, 128>}]} {
    %c0 = arith.constant 0 : index
    %c0_0 = arith.constant 0 : index
    %c0_1 = arith.constant 0 : index
    %0 = vector.load %arg2[%c0, %c0_0, %c0_1] : memref<2x16x128xbf16, #tpu.memory_space<vmem>>, vector<2x16x128xbf16>
    %1 = arith.extf %0 : vector<2x16x128xbf16> to vector<2x16x128xf32>
    %c0_2 = arith.constant 0 : index
    %c0_3 = arith.constant 0 : index
    %c0_4 = arith.constant 0 : index
    %2 = vector.load %arg3[%c0_2, %c0_3, %c0_4] : memref<2x16x128xbf16, #tpu.memory_space<vmem>>, vector<2x16x128xbf16>
    %3 = arith.extf %2 : vector<2x16x128xbf16> to vector<2x16x128xf32>
    %c0_5 = arith.constant 0 : index
    %c0_6 = arith.constant 0 : index
    %4 = vector.load %arg5[%c0_5, %c0_6] : memref<2x1xi32, #tpu.memory_space<vmem>>, vector<2x1xi32>
    %5 = tpu.iota {dimensions = array<i32: 1>} : vector<2x128xi32>
    %cst = arith.constant 0.000000e+00 : f32
    %6 = vector.broadcast %cst : f32 to vector<2x128xf32>
    %cst_7 = arith.constant 0.000000e+00 : f32
    %7 = vector.broadcast %cst_7 : f32 to vector<2x1xf32>
    %c0_i32 = arith.constant 0 : i32
    %c8_i32 = arith.constant 8 : i32
    %8 = arith.addi %c0_i32, %c8_i32 : i32
    %c1_i32 = arith.constant 1 : i32
    %9:2 = scf.for %arg16 = %c0_i32 to %8 step %c1_i32 iter_args(%arg17 = %6, %arg18 = %7) -> (vector<2x128xf32>, vector<2x1xf32>)  : i32 {
      %17 = arith.truncf %arg17 : vector<2x128xf32> to vector<2x128xbf16>
      %18 = arith.index_cast %arg16 : i32 to index
      %c0_13 = arith.constant 0 : index
      %c0_14 = arith.constant 0 : index
      %19 = vector.load %arg1[%18, %c0_13, %c0_14] : memref<8x2x128xbf16, #tpu.memory_space<vmem>>, vector<1x2x128xbf16>
      %20 = vector.shape_cast %19 : vector<1x2x128xbf16> to vector<2x128xbf16>
      %21 = arith.index_cast %arg16 : i32 to index
      %c0_15 = arith.constant 0 : index
      %c0_16 = arith.constant 0 : index
      %22 = vector.load %arg4[%21, %c0_15, %c0_16] : memref<8x2x1xi32, #tpu.memory_space<vmem>>, vector<1x2x1xi32>
      %23 = vector.shape_cast %22 : vector<1x2x1xi32> to vector<2x1xi32>
      %c0_17 = arith.constant 0 : index
      %c0_18 = arith.constant 0 : index
      %24 = vector.load %arg6[%c0_17, %c0_18] : memref<128x128xbf16, #tpu.memory_space<vmem>>, vector<128x128xbf16>
      %cst_19 = arith.constant dense<0.000000e+00> : vector<2x128xf32>
      %25 = tpu.matmul %17, %24, %cst_19 {dimension_numbers = #tpu.dot_dimension_numbers<[1], [0], [0], [1], [0, 0, 1, 1], [], []>} : vector<2x128xbf16>, vector<128x128xbf16>, vector<2x128xf32> -> vector<2x128xf32>
      %26 = vector.shape_cast %25 : vector<2x128xf32> to vector<2x1x128xf32>
      %27 = vector.broadcast %26 : vector<2x1x128xf32> to vector<2x16x128xf32>
      %28 = arith.addf %3, %27 : vector<2x16x128xf32>
      %29 = math.tanh %28 : vector<2x16x128xf32>
      %c0_20 = arith.constant 0 : index
      %c0_21 = arith.constant 0 : index
      %30 = vector.load %arg7[%c0_20, %c0_21] : memref<1x128xf32, #tpu.memory_space<vmem>>, vector<1x128xf32>
      %31 = vector.shape_cast %30 : vector<1x128xf32> to vector<1x1x128xf32>
      %32 = vector.broadcast %31 : vector<1x1x128xf32> to vector<2x16x128xf32>
      %33 = arith.mulf %29, %32 : vector<2x16x128xf32>
      %cst_22 = arith.constant dense<0.000000e+00> : vector<2x16xf32>
      %34 = vector.multi_reduction <add>, %33, %cst_22 [2] : vector<2x16x128xf32> to vector<2x16xf32>
      %35 = vector.shape_cast %34 : vector<2x16xf32> to vector<2x16x1xf32>
      %cst_23 = arith.constant dense<0xFF800000> : vector<2x1xf32>
      %36 = vector.multi_reduction <maximumf>, %35, %cst_23 [1] : vector<2x16x1xf32> to vector<2x1xf32>
      %37 = vector.shape_cast %36 : vector<2x1xf32> to vector<2x1x1xf32>
      %38 = vector.broadcast %37 : vector<2x1x1xf32> to vector<2x16x1xf32>
      %39 = arith.subf %35, %38 : vector<2x16x1xf32>
      %40 = math.exp %39 : vector<2x16x1xf32>
      %cst_24 = arith.constant dense<0.000000e+00> : vector<2x1xf32>
      %41 = vector.multi_reduction <add>, %40, %cst_24 [1] : vector<2x16x1xf32> to vector<2x1xf32>
      %42 = vector.shape_cast %41 : vector<2x1xf32> to vector<2x1x1xf32>
      %43 = tpu.reciprocal %42 {approx = true} : vector<2x1x1xf32> -> vector<2x1x1xf32>
      %44 = vector.broadcast %43 : vector<2x1x1xf32> to vector<2x16x1xf32>
      %45 = arith.mulf %40, %44 : vector<2x16x1xf32>
      %46 = vector.broadcast %45 : vector<2x16x1xf32> to vector<2x16x128xf32>
      %47 = arith.mulf %46, %1 : vector<2x16x128xf32>
      %cst_25 = arith.constant dense<0.000000e+00> : vector<2x128xf32>
      %48 = vector.multi_reduction <add>, %47, %cst_25 [1] : vector<2x16x128xf32> to vector<2x128xf32>
      %c0_26 = arith.constant 0 : index
      %c0_27 = arith.constant 0 : index
      %49 = vector.load %arg8[%c0_26, %c0_27] : memref<128x384xbf16, #tpu.memory_space<vmem>>, vector<128x384xbf16>
      %cst_28 = arith.constant dense<0.000000e+00> : vector<2x384xf32>
      %50 = tpu.matmul %20, %49, %cst_28 {dimension_numbers = #tpu.dot_dimension_numbers<[1], [0], [0], [1], [0, 0, 1, 1], [], []>} : vector<2x128xbf16>, vector<128x384xbf16>, vector<2x384xf32> -> vector<2x384xf32>
      %51 = arith.truncf %48 : vector<2x128xf32> to vector<2x128xbf16>
      %c0_29 = arith.constant 0 : index
      %c0_30 = arith.constant 0 : index
      %52 = vector.load %arg9[%c0_29, %c0_30] : memref<128x384xbf16, #tpu.memory_space<vmem>>, vector<128x384xbf16>
      %cst_31 = arith.constant dense<0.000000e+00> : vector<2x384xf32>
      %53 = tpu.matmul %51, %52, %cst_31 {dimension_numbers = #tpu.dot_dimension_numbers<[1], [0], [0], [1], [0, 0, 1, 1], [], []>} : vector<2x128xbf16>, vector<128x384xbf16>, vector<2x384xf32> -> vector<2x384xf32>
      %54 = arith.addf %50, %53 : vector<2x384xf32>
      %c0_32 = arith.constant 0 : index
      %c0_33 = arith.constant 0 : index
      %55 = vector.load %arg10[%c0_32, %c0_33] : memref<1x384xf32, #tpu.memory_space<vmem>>, vector<1x384xf32>
      %56 = vector.broadcast %55 : vector<1x384xf32> to vector<2x384xf32>
      %57 = arith.addf %54, %56 : vector<2x384xf32>
      %c0_34 = arith.constant 0 : index
      %c0_35 = arith.constant 0 : index
      %58 = vector.load %arg11[%c0_34, %c0_35] : memref<128x384xbf16, #tpu.memory_space<vmem>>, vector<128x384xbf16>
      %cst_36 = arith.constant dense<0.000000e+00> : vector<2x384xf32>
      %59 = tpu.matmul %17, %58, %cst_36 {dimension_numbers = #tpu.dot_dimension_numbers<[1], [0], [0], [1], [0, 0, 1, 1], [], []>} : vector<2x128xbf16>, vector<128x384xbf16>, vector<2x384xf32> -> vector<2x384xf32>
      %c0_37 = arith.constant 0 : index
      %c0_38 = arith.constant 0 : index
      %60 = vector.load %arg12[%c0_37, %c0_38] : memref<1x384xf32, #tpu.memory_space<vmem>>, vector<1x384xf32>
      %61 = vector.broadcast %60 : vector<1x384xf32> to vector<2x384xf32>
      %62 = arith.addf %59, %61 : vector<2x384xf32>
      %63 = vector.extract_strided_slice %57 {offsets = [0, 0], sizes = [2, 128], strides = [1, 1]} : vector<2x384xf32> to vector<2x128xf32>
      %64 = vector.extract_strided_slice %62 {offsets = [0, 0], sizes = [2, 128], strides = [1, 1]} : vector<2x384xf32> to vector<2x128xf32>
      %65 = arith.addf %63, %64 : vector<2x128xf32>
      %66 = arith.negf %65 : vector<2x128xf32>
      %67 = math.exp %66 : vector<2x128xf32>
      %cst_39 = arith.constant 1.000000e+00 : f32
      %68 = vector.broadcast %cst_39 : f32 to vector<2x128xf32>
      %69 = arith.addf %68, %67 : vector<2x128xf32>
      %70 = arith.divf %68, %69 : vector<2x128xf32>
      %71 = vector.extract_strided_slice %57 {offsets = [0, 128], sizes = [2, 128], strides = [1, 1]} : vector<2x384xf32> to vector<2x128xf32>
      %72 = vector.extract_strided_slice %62 {offsets = [0, 128], sizes = [2, 128], strides = [1, 1]} : vector<2x384xf32> to vector<2x128xf32>
      %73 = arith.addf %71, %72 : vector<2x128xf32>
      %74 = arith.negf %73 : vector<2x128xf32>
      %75 = math.exp %74 : vector<2x128xf32>
      %cst_40 = arith.constant 1.000000e+00 : f32
      %76 = vector.broadcast %cst_40 : f32 to vector<2x128xf32>
      %77 = arith.addf %76, %75 : vector<2x128xf32>
      %78 = arith.divf %76, %77 : vector<2x128xf32>
      %79 = vector.extract_strided_slice %57 {offsets = [0, 256], sizes = [2, 128], strides = [1, 1]} : vector<2x384xf32> to vector<2x128xf32>
      %80 = vector.extract_strided_slice %62 {offsets = [0, 256], sizes = [2, 128], strides = [1, 1]} : vector<2x384xf32> to vector<2x128xf32>
      %81 = arith.mulf %70, %80 : vector<2x128xf32>
      %82 = arith.addf %79, %81 : vector<2x128xf32>
      %83 = math.tanh %82 : vector<2x128xf32>
      %cst_41 = arith.constant 1.000000e+00 : f32
      %84 = vector.broadcast %cst_41 : f32 to vector<2x128xf32>
      %85 = arith.subf %84, %78 : vector<2x128xf32>
      %86 = arith.mulf %85, %83 : vector<2x128xf32>
      %87 = arith.mulf %78, %arg17 : vector<2x128xf32>
      %88 = arith.addf %86, %87 : vector<2x128xf32>
      %89 = arith.truncf %88 : vector<2x128xf32> to vector<2x128xbf16>
      %c0_42 = arith.constant 0 : index
      %c0_43 = arith.constant 0 : index
      %90 = vector.load %arg13[%c0_42, %c0_43] : memref<128x128xbf16, #tpu.memory_space<vmem>>, vector<128x128xbf16>
      %cst_44 = arith.constant dense<0.000000e+00> : vector<2x128xf32>
      %91 = tpu.matmul %89, %90, %cst_44 {dimension_numbers = #tpu.dot_dimension_numbers<[1], [0], [0], [1], [0, 0, 1, 1], [], []>} : vector<2x128xbf16>, vector<128x128xbf16>, vector<2x128xf32> -> vector<2x128xf32>
      %c0_45 = arith.constant 0 : index
      %c0_46 = arith.constant 0 : index
      %92 = vector.load %arg14[%c0_45, %c0_46] : memref<1x128xf32, #tpu.memory_space<vmem>>, vector<1x128xf32>
      %93 = vector.broadcast %92 : vector<1x128xf32> to vector<2x128xf32>
      %94 = arith.addf %91, %93 : vector<2x128xf32>
      %c16_i32 = arith.constant 16 : i32
      %95 = vector.broadcast %c16_i32 : i32 to vector<2x128xi32>
      %96 = arith.cmpi slt, %5, %95 : vector<2x128xi32>
      %cst_47 = arith.constant -1.000000e+30 : f32
      %97 = vector.broadcast %cst_47 : f32 to vector<2x128xf32>
      %98 = arith.select %96, %94, %97 : vector<2x128xi1>, vector<2x128xf32>
      %cst_48 = arith.constant dense<0xFF800000> : vector<2xf32>
      %99 = vector.multi_reduction <maximumf>, %98, %cst_48 [1] : vector<2x128xf32> to vector<2xf32>
      %100 = vector.shape_cast %99 : vector<2xf32> to vector<2x1xf32>
      %101 = vector.broadcast %100 : vector<2x1xf32> to vector<2x128xf32>
      %102 = arith.subf %98, %101 : vector<2x128xf32>
      %103 = math.exp %102 : vector<2x128xf32>
      %cst_49 = arith.constant dense<0.000000e+00> : vector<2xf32>
      %104 = vector.multi_reduction <add>, %103, %cst_49 [1] : vector<2x128xf32> to vector<2xf32>
      %105 = vector.shape_cast %104 : vector<2xf32> to vector<2x1xf32>
      %106 = math.log %105 : vector<2x1xf32>
      %107 = arith.addf %100, %106 : vector<2x1xf32>
      %108 = vector.broadcast %107 : vector<2x1xf32> to vector<2x128xf32>
      %109 = arith.subf %98, %108 : vector<2x128xf32>
      %110 = vector.broadcast %23 : vector<2x1xi32> to vector<2x128xi32>
      %111 = arith.cmpi eq, %5, %110 : vector<2x128xi32>
      %112 = arith.extui %111 : vector<2x128xi1> to vector<2x128xi32>
      %113 = arith.sitofp %112 : vector<2x128xi32> to vector<2x128xf32>
      %114 = arith.mulf %109, %113 : vector<2x128xf32>
      %cst_50 = arith.constant dense<0.000000e+00> : vector<2xf32>
      %115 = vector.multi_reduction <add>, %114, %cst_50 [1] : vector<2x128xf32> to vector<2xf32>
      %116 = vector.shape_cast %115 : vector<2xf32> to vector<2x1xf32>
      %117 = vector.broadcast %arg16 : i32 to vector<2x1xi32>
      %118 = arith.cmpi slt, %117, %4 : vector<2x1xi32>
      %119 = arith.extui %118 : vector<2x1xi1> to vector<2x1xi32>
      %120 = arith.sitofp %119 : vector<2x1xi32> to vector<2x1xf32>
      %121 = arith.mulf %116, %120 : vector<2x1xf32>
      %122 = arith.subf %arg18, %121 : vector<2x1xf32>
      scf.yield %88, %122 : vector<2x128xf32>, vector<2x1xf32>
    }
    %c8_i32_8 = arith.constant 8 : i32
    %cst_9 = arith.constant dense<0.000000e+00> : vector<1xf32>
    %10 = vector.multi_reduction <add>, %9#1, %cst_9 [0] : vector<2x1xf32> to vector<1xf32>
    %11 = vector.shape_cast %10 : vector<1xf32> to vector<1x1xf32>
    %cst_10 = arith.constant 5.000000e-01 : f32
    %12 = vector.broadcast %cst_10 : f32 to vector<1x1xf32>
    %13 = arith.mulf %11, %12 : vector<1x1xf32>
    %14 = vector.shape_cast %13 : vector<1x1xf32> to vector<1x1xf32>
    %15 = vector.broadcast %14 : vector<1x1xf32> to vector<8x128xf32>
    %c0_11 = arith.constant 0 : index
    %c0_12 = arith.constant 0 : index
    %16 = vector.load %arg15[%c0_11, %c0_12] : memref<8x128xf32, #tpu.memory_space<vmem>>, vector<8x128xf32>
    tpu.vector_store %arg15[%c0_11, %c0_12], %15 {strides = array<i32>} : memref<8x128xf32, #tpu.memory_space<vmem>>, vector<8x128xf32>,
    return
  }
  func.func @transform_0(%arg0: i32) -> (i32, i32, i32) {
    %c0_i32 = arith.constant 0 : i32
    %c0_i32_0 = arith.constant 0 : i32
    %c0_i32_1 = arith.constant 0 : i32
    return %c0_i32, %arg0, %c0_i32_0 : i32, i32, i32
  }
  func.func @transform_1(%arg0: i32) -> (i32, i32, i32) {
    %c0_i32 = arith.constant 0 : i32
    %c0_i32_0 = arith.constant 0 : i32
    %c0_i32_1 = arith.constant 0 : i32
    return %arg0, %c0_i32, %c0_i32_0 : i32, i32, i32
  }
  func.func @transform_2(%arg0: i32) -> (i32, i32, i32) {
    %c0_i32 = arith.constant 0 : i32
    %c0_i32_0 = arith.constant 0 : i32
    %c0_i32_1 = arith.constant 0 : i32
    return %arg0, %c0_i32, %c0_i32_0 : i32, i32, i32
  }
  func.func @transform_3(%arg0: i32) -> (i32, i32, i32) {
    %c0_i32 = arith.constant 0 : i32
    %c0_i32_0 = arith.constant 0 : i32
    %c0_i32_1 = arith.constant 0 : i32
    return %c0_i32, %arg0, %c0_i32_0 : i32, i32, i32
  }
  func.func @transform_4(%arg0: i32) -> (i32, i32) {
    %c0_i32 = arith.constant 0 : i32
    %c0_i32_0 = arith.constant 0 : i32
    return %arg0, %c0_i32 : i32, i32
  }
  func.func @transform_5(%arg0: i32) -> (i32, i32) {
    %c0_i32 = arith.constant 0 : i32
    %c0_i32_0 = arith.constant 0 : i32
    %c0_i32_1 = arith.constant 0 : i32
    return %c0_i32, %c0_i32_0 : i32, i32
  }
  func.func @transform_6(%arg0: i32) -> (i32, i32) {
    %c0_i32 = arith.constant 0 : i32
    %c0_i32_0 = arith.constant 0 : i32
    %c0_i32_1 = arith.constant 0 : i32
    return %c0_i32, %c0_i32_0 : i32, i32
  }
  func.func @transform_7(%arg0: i32) -> (i32, i32) {
    %c0_i32 = arith.constant 0 : i32
    %c0_i32_0 = arith.constant 0 : i32
    %c0_i32_1 = arith.constant 0 : i32
    return %c0_i32, %c0_i32_0 : i32, i32
  }
  func.func @transform_8(%arg0: i32) -> (i32, i32) {
    %c0_i32 = arith.constant 0 : i32
    %c0_i32_0 = arith.constant 0 : i32
    %c0_i32_1 = arith.constant 0 : i32
    return %c0_i32, %c0_i32_0 : i32, i32
  }
  func.func @transform_9(%arg0: i32) -> (i32, i32) {
    %c0_i32 = arith.constant 0 : i32
    %c0_i32_0 = arith.constant 0 : i32
    %c0_i32_1 = arith.constant 0 : i32
    return %c0_i32, %c0_i32_0 : i32, i32
  }
  func.func @transform_10(%arg0: i32) -> (i32, i32) {
    %c0_i32 = arith.constant 0 : i32
    %c0_i32_0 = arith.constant 0 : i32
    %c0_i32_1 = arith.constant 0 : i32
    return %c0_i32, %c0_i32_0 : i32, i32
  }
  func.func @transform_11(%arg0: i32) -> (i32, i32) {
    %c0_i32 = arith.constant 0 : i32
    %c0_i32_0 = arith.constant 0 : i32
    %c0_i32_1 = arith.constant 0 : i32
    return %c0_i32, %c0_i32_0 : i32, i32
  }
  func.func @transform_12(%arg0: i32) -> (i32, i32) {
    %c0_i32 = arith.constant 0 : i32
    %c0_i32_0 = arith.constant 0 : i32
    %c0_i32_1 = arith.constant 0 : i32
    return %c0_i32, %c0_i32_0 : i32, i32
  }
  func.func @transform_13(%arg0: i32) -> (i32, i32) {
    %c0_i32 = arith.constant 0 : i32
    %c0_i32_0 = arith.constant 0 : i32
    %c0_i32_1 = arith.constant 0 : i32
    return %c0_i32, %c0_i32_0 : i32, i32
  }
  func.func @transform_14(%arg0: i32) -> (i32, i32) {
    %c0_i32 = arith.constant 0 : i32
    %c0_i32_0 = arith.constant 0 : i32
    return %arg0, %c0_i32 : i32, i32
  }
}

</mosaic_0001>

<llo_original>
// kernel: model_forward.2
$region0: #{model_forward.2}
  #allocation0 [shape = 'u32[]', space=smem, size = 0x4, offset = 0x4, fixed_abs, tag = 'smem constant byte address 0x4 - core index']
  #allocation1 [shape = 'u32[144,128]{1,0:T(1,128)}', space=vmem, size = 0x12000, scoped, tag = 'internal scratch']
  %s0 = inlined_call_operand.vmem [shape: f32[2,10,18,3], index: 0, kind: input, shape index: {}]
  %s1 = inlined_call_operand.vmem [shape: bf16[27,128], index: 1, kind: input, shape index: {}]
  %s2 = inlined_call_operand.vmem [shape: f32[1,128], index: 2, kind: input, shape index: {}]
  %s3 = inlined_call_operand.vmem [shape: bf16[128,128], index: 3, kind: input, shape index: {}]
  %s4 = inlined_call_operand.vmem [shape: f32[1,128], index: 4, kind: input, shape index: {}]
  %s5 = inlined_call_operand.vmem [shape: bf16[128,128], index: 5, kind: input, shape index: {}]
  %s6 = inlined_call_operand.vmem [shape: f32[1,128], index: 6, kind: input, shape index: {}]
  %s7 = inlined_call_operand.vmem [shape: bf16[2,16,128], index: 7, kind: output, shape index: {0}]
  %s8 = inlined_call_operand.vmem [shape: bf16[2,16,128], index: 8, kind: output, shape index: {1}]
  %9 = xla_tuple %s7, %s8
  %s10 = sld [smem:[#allocation0]]
  $region69: #{model_forward.2} parent=0
    _
  %s12 = ssub.s32 1, %s10
  %s13 = scalar_select 0, %s12, %s10
  loop: start=0, step=1, limit=4
  $region2: #{model_forward.2} parent=0 // loop_pre_header
    _
  $region3: #{model_forward.2} parent=0 // loop_header
    %s15 = sphi 0, %s19
    %p16 = scmp.ge.s32.totalorder %s15, 4
    %s25 = sphi 0, %s27
    %s28 = sphi 0, %s25
    %s29 = sphi 0, %s28
    %s45 = sphi 0, %s29
    %s49 = sphi 0, %s49
    %s51 = sphi 0, %s49
    %s52 = sphi 0, %s51
    %s66 = sphi 0, %s52
    %s70 = sphi 0, %s70
    %s72 = sphi 0, %s70
    %s73 = sphi 0, %s72
    %s87 = sphi 0, %s73
    %s91 = sphi 0, %s91
    %s93 = sphi 0, %s91
    %s94 = sphi 0, %s93
    %s108 = sphi 0, %s94
    %s112 = sphi 0, %s112
    %s114 = sphi 0, %s112
    %s115 = sphi 0, %s114
    %s129 = sphi 0, %s115
    %s133 = sphi 0, %s133
    %s135 = sphi 0, %s133
    %s136 = sphi 0, %s135
    %s150 = sphi 0, %s136
    %s154 = sphi 0, %s154
    %s156 = sphi 0, %s154
    %s157 = sphi 0, %s156
    %s171 = sphi 0, %s157
    %s177 = sphi 0, %s179
    %s180 = sphi 0, %s177
    %s181 = sphi 0, %s180
    %s197 = sphi 0, %s181
    %s203 = sphi 0, %s205
    %s206 = sphi 0, %s203
    %s207 = sphi 0, %s206
    %s223 = sphi 0, %s207
  $region4: #{model_forward.2} parent=0 // loop_header_branch
    %18 = sbr.rel (%p16) target = $region8
  $region5: #{model_forward.2} parent=0 // loop_body
    %s20 = ssub.s32 %s15, 1
    %s21 = ssub.s32 %s15, 2
    %s22 = sadd.s32 %s15, 1
    %s23 = ssub.s32 %s15, %s22
    %p24 = scmp.eq.s32.totalorder %s23, 0
    %s26 = sadd.s32 %s25, 1
    %s27 = scalar_select %p24, %s25, %s26
    %p30 = pneg %p24
    %p31 = scmp.eq.s32.totalorder %s15, 1
    %p32 = por %p30, %p31
    %p33 = scmp.ne.s32.totalorder %s25, %s28
    %p34 = scmp.eq.s32.totalorder %s15, 0
    %p35 = por %p33, %p34
    %p36 = scmp.ne.s32.totalorder %s25, %s28
    %p37 = scmp.eq.s32.totalorder %s20, 1
    %p38 = por %p36, %p37
    %p39 = scmp.ne.s32.totalorder %s28, %s29
    %p40 = scmp.eq.s32.totalorder %s20, 0
    %p41 = por %p39, %p40
    %p42 = scmp.ne.s32.totalorder %s28, %s29
    %p43 = scmp.eq.s32.totalorder %s21, 1
    %p44 = por %p42, %p43
    %p46 = scmp.ne.s32.totalorder %s29, %s45
    %p47 = scmp.eq.s32.totalorder %s21, 0
    %p48 = por %p46, %p47
    %s50 = sadd.s32 %s49, 1
    %p53 = scmp.eq.s32.totalorder %s15, 1
    %p54 = scmp.ne.s32.totalorder %s49, %s51
    %p55 = scmp.eq.s32.totalorder %s15, 0
    %p56 = por %p54, %p55
    %p57 = scmp.ne.s32.totalorder %s49, %s51
    %p58 = scmp.eq.s32.totalorder %s20, 1
    %p59 = por %p57, %p58
    %p60 = scmp.ne.s32.totalorder %s51, %s52
    %p61 = scmp.eq.s32.totalorder %s20, 0
    %p62 = por %p60, %p61
    %p63 = scmp.ne.s32.totalorder %s51, %s52
    %p64 = scmp.eq.s32.totalorder %s21, 1
    %p65 = por %p63, %p64
    %p67 = scmp.ne.s32.totalorder %s52, %s66
    %p68 = scmp.eq.s32.totalorder %s21, 0
    %p69 = por %p67, %p68
    %s71 = sadd.s32 %s70, 1
    %p74 = scmp.eq.s32.totalorder %s15, 1
    %p75 = scmp.ne.s32.totalorder %s70, %s72
    %p76 = scmp.eq.s32.totalorder %s15, 0
    %p77 = por %p75, %p76
    %p78 = scmp.ne.s32.totalorder %s70, %s72
    %p79 = scmp.eq.s32.totalorder %s20, 1
    %p80 = por %p78, %p79
    %p81 = scmp.ne.s32.totalorder %s72, %s73
    %p82 = scmp.eq.s32.totalorder %s20, 0
    %p83 = por %p81, %p82
    %p84 = scmp.ne.s32.totalorder %s72, %s73
    %p85 = scmp.eq.s32.totalorder %s21, 1
    %p86 = por %p84, %p85
    %p88 = scmp.ne.s32.totalorder %s73, %s87
    %p89 = scmp.eq.s32.totalorder %s21, 0
    %p90 = por %p88, %p89
    %s92 = sadd.s32 %s91, 1
    %p95 = scmp.eq.s32.totalorder %s15, 1
    %p96 = scmp.ne.s32.totalorder %s91, %s93
    %p97 = scmp.eq.s32.totalorder %s15, 0
    %p98 = por %p96, %p97
    %p99 = scmp.ne.s32.totalorder %s91, %s93
    %p100 = scmp.eq.s32.totalorder %s20, 1
    %p101 = por %p99, %p100
    %p102 = scmp.ne.s32.totalorder %s93, %s94
    %p103 = scmp.eq.s32.totalorder %s20, 0
    %p104 = por %p102, %p103
    %p105 = scmp.ne.s32.totalorder %s93, %s94
    %p106 = scmp.eq.s32.totalorder %s21, 1
    %p107 = por %p105, %p106
    %p109 = scmp.ne.s32.totalorder %s94, %s108
    %p110 = scmp.eq.s32.totalorder %s21, 0
    %p111 = por %p109, %p110
    %s113 = sadd.s32 %s112, 1
    %p116 = scmp.eq.s32.totalorder %s15, 1
    %p117 = scmp.ne.s32.totalorder %s112, %s114
    %p118 = scmp.eq.s32.totalorder %s15, 0
    %p119 = por %p117, %p118
    %p120 = scmp.ne.s32.totalorder %s112, %s114
    %p121 = scmp.eq.s32.totalorder %s20, 1
    %p122 = por %p120, %p121
    %p123 = scmp.ne.s32.totalorder %s114, %s115
    %p124 = scmp.eq.s32.totalorder %s20, 0
    %p125 = por %p123, %p124
    %p126 = scmp.ne.s32.totalorder %s114, %s115
    %p127 = scmp.eq.s32.totalorder %s21, 1
    %p128 = por %p126, %p127
    %p130 = scmp.ne.s32.totalorder %s115, %s129
    %p131 = scmp.eq.s32.totalorder %s21, 0
    %p132 = por %p130, %p131
    %s134 = sadd.s32 %s133, 1
    %p137 = scmp.eq.s32.totalorder %s15, 1
    %p138 = scmp.ne.s32.totalorder %s133, %s135
    %p139 = scmp.eq.s32.totalorder %s15, 0
    %p140 = por %p138, %p139
    %p141 = scmp.ne.s32.totalorder %s133, %s135
    %p142 = scmp.eq.s32.totalorder %s20, 1
    %p143 = por %p141, %p142
    %p144 = scmp.ne.s32.totalorder %s135, %s136
    %p145 = scmp.eq.s32.totalorder %s20, 0
    %p146 = por %p144, %p145
    %p147 = scmp.ne.s32.totalorder %s135, %s136
    %p148 = scmp.eq.s32.totalorder %s21, 1
    %p149 = por %p147, %p148
    %p151 = scmp.ne.s32.totalorder %s136, %s150
    %p152 = scmp.eq.s32.totalorder %s21, 0
    %p153 = por %p151, %p152
    %s155 = sadd.s32 %s154, 1
    %p158 = scmp.eq.s32.totalorder %s15, 1
    %p159 = scmp.ne.s32.totalorder %s154, %s156
    %p160 = scmp.eq.s32.totalorder %s15, 0
    %p161 = por %p159, %p160
    %p162 = scmp.ne.s32.totalorder %s154, %s156
    %p163 = scmp.eq.s32.totalorder %s20, 1
    %p164 = por %p162, %p163
    %p165 = scmp.ne.s32.totalorder %s156, %s157
    %p166 = scmp.eq.s32.totalorder %s20, 0
    %p167 = por %p165, %p166
    %p168 = scmp.ne.s32.totalorder %s156, %s157
    %p169 = scmp.eq.s32.totalorder %s21, 1
    %p170 = por %p168, %p169
    %p172 = scmp.ne.s32.totalorder %s157, %s171
    %p173 = scmp.eq.s32.totalorder %s21, 0
    %p174 = por %p172, %p173
    %s175 = ssub.s32 %s15, %s22
    %p176 = scmp.eq.s32.totalorder %s175, 0
    %s178 = sadd.s32 %s177, 1
    %s179 = scalar_select %p176, %s177, %s178
    %p182 = pneg %p176
    %p183 = scmp.eq.s32.totalorder %s15, 1
    %p184 = por %p182, %p183
    %p185 = scmp.ne.s32.totalorder %s177, %s180
    %p186 = scmp.eq.s32.totalorder %s15, 0
    %p187 = por %p185, %p186
    %p188 = scmp.ne.s32.totalorder %s177, %s180
    %p189 = scmp.eq.s32.totalorder %s20, 1
    %p190 = por %p188, %p189
    %p191 = scmp.ne.s32.totalorder %s180, %s181
    %p192 = scmp.eq.s32.totalorder %s20, 0
    %p193 = por %p191, %p192
    %p194 = scmp.ne.s32.totalorder %s180, %s181
    %p195 = scmp.eq.s32.totalorder %s21, 1
    %p196 = por %p194, %p195
    %p198 = scmp.ne.s32.totalorder %s181, %s197
    %p199 = scmp.eq.s32.totalorder %s21, 0
    %p200 = por %p198, %p199
    %s201 = ssub.s32 %s15, %s22
    %p202 = scmp.eq.s32.totalorder %s201, 0
    %s204 = sadd.s32 %s203, 1
    %s205 = scalar_select %p202, %s203, %s204
    %p208 = pneg %p202
    %p209 = scmp.eq.s32.totalorder %s15, 1
    %p210 = por %p208, %p209
    %p211 = scmp.ne.s32.totalorder %s203, %s206
    %p212 = scmp.eq.s32.totalorder %s15, 0
    %p213 = por %p211, %p212
    %p214 = scmp.ne.s32.totalorder %s203, %s206
    %p215 = scmp.eq.s32.totalorder %s20, 1
    %p216 = por %p214, %p215
    %p217 = scmp.ne.s32.totalorder %s206, %s207
    %p218 = scmp.eq.s32.totalorder %s20, 0
    %p219 = por %p217, %p218
    %p220 = scmp.ne.s32.totalorder %s206, %s207
    %p221 = scmp.eq.s32.totalorder %s21, 1
    %p222 = por %p220, %p221
    %p224 = scmp.ne.s32.totalorder %s207, %s223
    %p225 = scmp.eq.s32.totalorder %s21, 0
    %p226 = por %p224, %p225
    %p227 = scmp.le.s32.totalorder 1, %s15
    %p228 = scmp.lt.s32.totalorder %s15, 3
    %p229 = pnand %p227, %p228
    %p230 = pneg %p229
    // Predicated region
    $region9: #{model_forward.2} parent=5 // pred_check
      _
    $region10: #{model_forward.2} parent=5 // pred_check_branch
      %232 = sbr.rel (%p229) target = $region12
    $region11: #{model_forward.2} parent=5 // pred_region
      %s233 = ssub.s32 %s15, 1
      // Predicated region
      $region13: #{model_forward.2} parent=11 // pred_check
        %p234 = pneg %p62
      $region14: #{model_forward.2} parent=11 // pred_check_branch
        %236 = sbr.rel (%p234) target = $region16
      $region15: #{model_forward.2} parent=11 // pred_region
        _
      $region16: #{model_forward.2} parent=11 // pred_fallthru
        _
      // Predicated region
      $region17: #{model_forward.2} parent=11 // pred_check
        %p237 = pneg %p83
      $region18: #{model_forward.2} parent=11 // pred_check_branch
        %239 = sbr.rel (%p237) target = $region20
      $region19: #{model_forward.2} parent=11 // pred_region
        _
      $region20: #{model_forward.2} parent=11 // pred_fallthru
        _
      // Predicated region
      $region21: #{model_forward.2} parent=11 // pred_check
        %p240 = pneg %p104
      $region22: #{model_forward.2} parent=11 // pred_check_branch
        %242 = sbr.rel (%p240) target = $region24
      $region23: #{model_forward.2} parent=11 // pred_region
        _
      $region24: #{model_forward.2} parent=11 // pred_fallthru
        _
      // Predicated region
      $region25: #{model_forward.2} parent=11 // pred_check
        %p243 = pneg %p125
      $region26: #{model_forward.2} parent=11 // pred_check_branch
        %245 = sbr.rel (%p243) target = $region28
      $region27: #{model_forward.2} parent=11 // pred_region
        _
      $region28: #{model_forward.2} parent=11 // pred_fallthru
        _
      // Predicated region
      $region29: #{model_forward.2} parent=11 // pred_check
        %p246 = pneg %p146
      $region30: #{model_forward.2} parent=11 // pred_check_branch
        %248 = sbr.rel (%p246) target = $region32
      $region31: #{model_forward.2} parent=11 // pred_region
        _
      $region32: #{model_forward.2} parent=11 // pred_fallthru
        _
      // Predicated region
      $region33: #{model_forward.2} parent=11 // pred_check
        %p249 = pneg %p167
      $region34: #{model_forward.2} parent=11 // pred_check_branch
        %251 = sbr.rel (%p249) target = $region36
      $region35: #{model_forward.2} parent=11 // pred_region
        _
      $region36: #{model_forward.2} parent=11 // pred_fallthru
        _
    $region12: #{model_forward.2} parent=5 // pred_fallthru
      _
    %p252 = scmp.lt.s32.totalorder %s15, 2
    // Predicated region
    $region37: #{model_forward.2} parent=5 // pred_check
      %p253 = pneg %p252
    $region38: #{model_forward.2} parent=5 // pred_check_branch
      %255 = sbr.rel (%p253) target = $region40
    $region39: #{model_forward.2} parent=5 // pred_region
      // Predicated region
      $region41: #{model_forward.2} parent=39 // pred_check
        %p256 = pneg %p35
      $region42: #{model_forward.2} parent=39 // pred_check_branch
        %258 = sbr.rel (%p256) target = $region44
      $region43: #{model_forward.2} parent=39 // pred_region
        %p259 = scmp.lt.s32.totalorder %s15, 1
        %s260 = scalar_select %p259, %s15, 1
        %s261 = smul.addr %s260, 30
        %s262 = smul.addr %s261, 8
        %s263 = scalar_lea.vmem %s0, %s262
      $region44: #{model_forward.2} parent=39 // pred_fallthru
        _
    $region40: #{model_forward.2} parent=5 // pred_fallthru
      _
    %p264 = scmp.le.s32.totalorder 1, %s15
    %p265 = scmp.lt.s32.totalorder %s15, 3
    %p266 = pnand %p264, %p265
    %p267 = pneg %p266
    // Predicated region
    $region45: #{model_forward.2} parent=5 // pred_check
      _
    $region46: #{model_forward.2} parent=5 // pred_check_branch
      %269 = sbr.rel (%p266) target = $region48
    $region47: #{model_forward.2} parent=5 // pred_region
      %s270 = ssub.s32 %s15, 1
      %p271 = scmp.lt.s32.totalorder %s20, 1
      %s272 = scalar_select %p271, %s20, 1
      %s273 = smul.addr %s272, 30
      %s274 = smul.addr %s273, 8
      %s275 = scalar_lea.vmem %s0, %s274
      %p276 = pneg %p41
      %p277 = pneg %p38
      %p278 = pneg %p62
      %p279 = pneg %p59
      %p280 = pneg %p83
      %p281 = pneg %p80
      %p282 = pneg %p104
      %p283 = pneg %p101
      %p284 = pneg %p125
      %p285 = pneg %p122
      %p286 = pneg %p146
      %p287 = pneg %p143
      %p288 = pneg %p167
      %p289 = pneg %p164
      %p290 = pneg %p193
      %p291 = pneg %p190
      %p292 = scmp.lt.s32.totalorder %s20, 1
      %s293 = scalar_select %p292, %s20, 1
      %s294 = smul.addr %s293, 2
      %s295 = smul.addr %s294, 4
      %s296 = scalar_lea.vmem %s7, %s295
      %p297 = pneg %p219
      %p298 = pneg %p216
      %p299 = scmp.lt.s32.totalorder %s20, 1
      %s300 = scalar_select %p299, %s20, 1
      %s301 = smul.addr %s300, 2
      %s302 = smul.addr %s301, 4
      %s303 = scalar_lea.vmem %s8, %s302
      %p304 = scmp.lt.s32.totalorder %s20, 1
      %s305 = scalar_select %p304, %s20, 1
      %s306 = smul.addr %s305, 30
      %s307 = smul.addr %s306, 8
      %s308 = scalar_lea.vmem %s0, %s307
      %p309 = scmp.lt.s32.totalorder %s20, 1
      %s310 = scalar_select %p309, %s20, 1
      %s311 = smul.addr %s310, 2
      %s312 = smul.addr %s311, 4
      %s313 = scalar_lea.vmem %s7, %s312
      %p314 = scmp.lt.s32.totalorder %s20, 1
      %s315 = scalar_select %p314, %s20, 1
      %s316 = smul.addr %s315, 2
      %s317 = smul.addr %s316, 4
      %s318 = scalar_lea.vmem %s8, %s317
      %v320 = vld [vmem:[%s308] sm:$0xff]
      %v321 = vld [vmem:[%s308 + $0x8] sm:$0xff]
      %v322 = vld [vmem:[%s308 + $0x10] sm:$0x3]
      %v323 = vld [vmem:[%s308 + $0x18] sm:$0xff]
      %v324 = vld [vmem:[%s308 + $0x20] sm:$0xff]
      %v325 = vld [vmem:[%s308 + $0x28] sm:$0x3]
      %v326 = vld [vmem:[%s308 + $0x30] sm:$0xff]
      %v327 = vld [vmem:[%s308 + $0x38] sm:$0xff]
      %v328 = vld [vmem:[%s308 + $0x40] sm:$0x3]
      %v329 = vld [vmem:[%s308 + $0x48] sm:$0xff]
      %v330 = vld [vmem:[%s308 + $0x50] sm:$0xff]
      %v331 = vld [vmem:[%s308 + $0x58] sm:$0x3]
      %v332 = vld [vmem:[%s308 + $0x60] sm:$0xff]
      %v333 = vld [vmem:[%s308 + $0x68] sm:$0xff]
      %v334 = vld [vmem:[%s308 + $0x70] sm:$0x3]
      %v335 = vld [vmem:[%s308 + $0x78] sm:$0xff]
      %v336 = vld [vmem:[%s308 + $0x80] sm:$0xff]
      %v337 = vld [vmem:[%s308 + $0x88] sm:$0x3]
      %v338 = vld [vmem:[%s308 + $0x90] sm:$0xff]
      %v339 = vld [vmem:[%s308 + $0x98] sm:$0xff]
      %v340 = vld [vmem:[%s308 + $0xa0] sm:$0x3]
      %v341 = vld [vmem:[%s308 + $0xa8] sm:$0xff]
      %v342 = vld [vmem:[%s308 + $0xb0] sm:$0xff]
      %v343 = vld [vmem:[%s308 + $0xb8] sm:$0x3]
      %v344 = vld [vmem:[%s308 + $0xc0] sm:$0xff]
      %v345 = vld [vmem:[%s308 + $0xc8] sm:$0xff]
      %v346 = vld [vmem:[%s308 + $0xd0] sm:$0x3]
      %v347 = vld [vmem:[%s308 + $0xd8] sm:$0xff]
      %v348 = vld [vmem:[%s308 + $0xe0] sm:$0xff]
      %v349 = vld [vmem:[%s308 + $0xe8] sm:$0x3]
      %vm374 = vcmask 1046528
      %v375 = vrot.slane %v320, 1
      %v376 = vrot.slane %v321, 1
      %v377 = vsel %vm374, %v375, %v376
      %v378 = vrot.slane %v322, 1
      %v379 = vsel %vm374, %v376, %v378
      %v380 = vrot.slane %v323, 1
      %v381 = vrot.slane %v324, 1
      %v382 = vsel %vm374, %v380, %v381
      %v383 = vrot.slane %v325, 1
      %v384 = vsel %vm374, %v381, %v383
      %v385 = vrot.slane %v326, 1
      %v386 = vrot.slane %v327, 1
      %v387 = vsel %vm374, %v385, %v386
      %v388 = vrot.slane %v328, 1
      %v389 = vsel %vm374, %v386, %v388
      %v390 = vrot.slane %v329, 1
      %v391 = vrot.slane %v330, 1
      %v392 = vsel %vm374, %v390, %v391
      %v393 = vrot.slane %v331, 1
      %v394 = vsel %vm374, %v391, %v393
      %v395 = vrot.slane %v332, 1
      %v396 = vrot.slane %v333, 1
      %v397 = vsel %vm374, %v395, %v396
      %v398 = vrot.slane %v334, 1
      %v399 = vsel %vm374, %v396, %v398
      %v400 = vrot.slane %v335, 1
      %v401 = vrot.slane %v336, 1
      %v402 = vsel %vm374, %v400, %v401
      %v403 = vrot.slane %v337, 1
      %v404 = vsel %vm374, %v401, %v403
      %v405 = vrot.slane %v338, 1
      %v406 = vrot.slane %v339, 1
      %v407 = vsel %vm374, %v405, %v406
      %v408 = vrot.slane %v340, 1
      %v409 = vsel %vm374, %v406, %v408
      %v410 = vrot.slane %v341, 1
      %v411 = vrot.slane %v342, 1
      %v412 = vsel %vm374, %v410, %v411
      %v413 = vrot.slane %v343, 1
      %v414 = vsel %vm374, %v411, %v413
      %vm415 = vcmask 1045504
      %v416 = vrot.slane %v320, 2
      %v417 = vrot.slane %v321, 2
      %v418 = vsel %vm415, %v416, %v417
      %v419 = vrot.slane %v322, 2
      %v420 = vsel %vm415, %v417, %v419
      %v421 = vrot.slane %v323, 2
      %v422 = vrot.slane %v324, 2
      %v423 = vsel %vm415, %v421, %v422
      %v424 = vrot.slane %v325, 2
      %v425 = vsel %vm415, %v422, %v424
      %v426 = vrot.slane %v326, 2
      %v427 = vrot.slane %v327, 2
      %v428 = vsel %vm415, %v426, %v427
      %v429 = vrot.slane %v328, 2
      %v430 = vsel %vm415, %v427, %v429
      %v431 = vrot.slane %v329, 2
      %v432 = vrot.slane %v330, 2
      %v433 = vsel %vm415, %v431, %v432
      %v434 = vrot.slane %v331, 2
      %v435 = vsel %vm415, %v432, %v434
      %v436 = vrot.slane %v332, 2
      %v437 = vrot.slane %v333, 2
      %v438 = vsel %vm415, %v436, %v437
      %v439 = vrot.slane %v334, 2
      %v440 = vsel %vm415, %v437, %v439
      %v441 = vrot.slane %v335, 2
      %v442 = vrot.slane %v336, 2
      %v443 = vsel %vm415, %v441, %v442
      %v444 = vrot.slane %v337, 2
      %v445 = vsel %vm415, %v442, %v444
      %v446 = vrot.slane %v338, 2
      %v447 = vrot.slane %v339, 2
      %v448 = vsel %vm415, %v446, %v447
      %v449 = vrot.slane %v340, 2
      %v450 = vsel %vm415, %v447, %v449
      %v451 = vrot.slane %v341, 2
      %v452 = vrot.slane %v342, 2
      %v453 = vsel %vm415, %v451, %v452
      %v454 = vrot.slane %v343, 2
      %v455 = vsel %vm415, %v452, %v454
      %v459 = vrot.slane %v344, 1
      %v460 = vrot.slane %v345, 1
      %v461 = vsel %vm374, %v459, %v460
      %v462 = vrot.slane %v346, 1
      %v463 = vsel %vm374, %v460, %v462
      %v464 = vrot.slane %v344, 2
      %v465 = vrot.slane %v345, 2
      %v466 = vsel %vm415, %v464, %v465
      %v467 = vrot.slane %v346, 2
      %v468 = vsel %vm415, %v465, %v467
      %v472 = vrot.slane %v347, 1
      %v473 = vrot.slane %v348, 1
      %v474 = vsel %vm374, %v472, %v473
      %v475 = vrot.slane %v349, 1
      %v476 = vsel %vm374, %v473, %v475
      %v477 = vrot.slane %v347, 2
      %v478 = vrot.slane %v348, 2
      %v479 = vsel %vm415, %v477, %v478
      %v480 = vrot.slane %v349, 2
      %v481 = vsel %vm415, %v478, %v480
      %482 = vrot.lane.b32.xlu0 %v377, 3
      %v483 = vpop.permute.xlu0 %482
      %484 = vrot.lane.b32.xlu0 %v379, 3
      %v485 = vpop.permute.xlu0 %484
      %486 = vrot.lane.b32.xlu0 %v382, 3
      %v487 = vpop.permute.xlu0 %486
      %488 = vrot.lane.b32.xlu0 %v384, 3
      %v489 = vpop.permute.xlu0 %488
      %490 = vrot.lane.b32.xlu0 %v387, 3
      %v491 = vpop.permute.xlu0 %490
      %492 = vrot.lane.b32.xlu0 %v389, 3
      %v493 = vpop.permute.xlu0 %492
      %494 = vrot.lane.b32.xlu0 %v392, 3
      %v495 = vpop.permute.xlu0 %494
      %496 = vrot.lane.b32.xlu0 %v394, 3
      %v497 = vpop.permute.xlu0 %496
      %498 = vrot.lane.b32.xlu0 %v397, 3
      %v499 = vpop.permute.xlu0 %498
      %500 = vrot.lane.b32.xlu0 %v399, 3
      %v501 = vpop.permute.xlu0 %500
      %502 = vrot.lane.b32.xlu0 %v402, 3
      %v503 = vpop.permute.xlu0 %502
      %504 = vrot.lane.b32.xlu0 %v404, 3
      %v505 = vpop.permute.xlu0 %504
      %506 = vrot.lane.b32.xlu0 %v407, 3
      %v507 = vpop.permute.xlu0 %506
      %508 = vrot.lane.b32.xlu0 %v409, 3
      %v509 = vpop.permute.xlu0 %508
      %510 = vrot.lane.b32.xlu0 %v412, 3
      %v511 = vpop.permute.xlu0 %510
      %512 = vrot.lane.b32.xlu0 %v414, 3
      %v513 = vpop.permute.xlu0 %512
      %530 = vrot.lane.b32.xlu0 %v418, 6
      %v531 = vpop.permute.xlu0 %530
      %532 = vrot.lane.b32.xlu0 %v420, 6
      %v533 = vpop.permute.xlu0 %532
      %534 = vrot.lane.b32.xlu0 %v423, 6
      %v535 = vpop.permute.xlu0 %534
      %536 = vrot.lane.b32.xlu0 %v425, 6
      %v537 = vpop.permute.xlu0 %536
      %538 = vrot.lane.b32.xlu0 %v428, 6
      %v539 = vpop.permute.xlu0 %538
      %540 = vrot.lane.b32.xlu0 %v430, 6
      %v541 = vpop.permute.xlu0 %540
      %542 = vrot.lane.b32.xlu0 %v433, 6
      %v543 = vpop.permute.xlu0 %542
      %544 = vrot.lane.b32.xlu0 %v435, 6
      %v545 = vpop.permute.xlu0 %544
      %546 = vrot.lane.b32.xlu0 %v438, 6
      %v547 = vpop.permute.xlu0 %546
      %548 = vrot.lane.b32.xlu0 %v440, 6
      %v549 = vpop.permute.xlu0 %548
      %550 = vrot.lane.b32.xlu0 %v443, 6
      %v551 = vpop.permute.xlu0 %550
      %552 = vrot.lane.b32.xlu0 %v445, 6
      %v553 = vpop.permute.xlu0 %552
      %554 = vrot.lane.b32.xlu0 %v448, 6
      %v555 = vpop.permute.xlu0 %554
      %556 = vrot.lane.b32.xlu0 %v450, 6
      %v557 = vpop.permute.xlu0 %556
      %558 = vrot.lane.b32.xlu0 %v453, 6
      %v559 = vpop.permute.xlu0 %558
      %560 = vrot.lane.b32.xlu0 %v455, 6
      %v561 = vpop.permute.xlu0 %560
      %578 = vrot.lane.b32.xlu0 %v323, 9
      %v579 = vpop.permute.xlu0 %578
      %580 = vrot.lane.b32.xlu0 %v324, 9
      %v581 = vpop.permute.xlu0 %580
      %582 = vrot.lane.b32.xlu0 %v326, 9
      %v583 = vpop.permute.xlu0 %582
      %584 = vrot.lane.b32.xlu0 %v327, 9
      %v585 = vpop.permute.xlu0 %584
      %586 = vrot.lane.b32.xlu0 %v329, 9
      %v587 = vpop.permute.xlu0 %586
      %588 = vrot.lane.b32.xlu0 %v330, 9
      %v589 = vpop.permute.xlu0 %588
      %590 = vrot.lane.b32.xlu0 %v332, 9
      %v591 = vpop.permute.xlu0 %590
      %592 = vrot.lane.b32.xlu0 %v333, 9
      %v593 = vpop.permute.xlu0 %592
      %594 = vrot.lane.b32.xlu0 %v335, 9
      %v595 = vpop.permute.xlu0 %594
      %596 = vrot.lane.b32.xlu0 %v336, 9
      %v597 = vpop.permute.xlu0 %596
      %598 = vrot.lane.b32.xlu0 %v338, 9
      %v599 = vpop.permute.xlu0 %598
      %600 = vrot.lane.b32.xlu0 %v339, 9
      %v601 = vpop.permute.xlu0 %600
      %602 = vrot.lane.b32.xlu0 %v341, 9
      %v603 = vpop.permute.xlu0 %602
      %604 = vrot.lane.b32.xlu0 %v342, 9
      %v605 = vpop.permute.xlu0 %604
      %606 = vrot.lane.b32.xlu0 %v344, 9
      %v607 = vpop.permute.xlu0 %606
      %608 = vrot.lane.b32.xlu0 %v345, 9
      %v609 = vpop.permute.xlu0 %608
      %626 = vrot.lane.b32.xlu0 %v382, 12
      %v627 = vpop.permute.xlu0 %626
      %628 = vrot.lane.b32.xlu0 %v384, 12
      %v629 = vpop.permute.xlu0 %628
      %630 = vrot.lane.b32.xlu0 %v387, 12
      %v631 = vpop.permute.xlu0 %630
      %632 = vrot.lane.b32.xlu0 %v389, 12
      %v633 = vpop.permute.xlu0 %632
      %634 = vrot.lane.b32.xlu0 %v392, 12
      %v635 = vpop.permute.xlu0 %634
      %636 = vrot.lane.b32.xlu0 %v394, 12
      %v637 = vpop.permute.xlu0 %636
      %638 = vrot.lane.b32.xlu0 %v397, 12
      %v639 = vpop.permute.xlu0 %638
      %640 = vrot.lane.b32.xlu0 %v399, 12
      %v641 = vpop.permute.xlu0 %640
      %642 = vrot.lane.b32.xlu0 %v402, 12
      %v643 = vpop.permute.xlu0 %642
      %644 = vrot.lane.b32.xlu0 %v404, 12
      %v645 = vpop.permute.xlu0 %644
      %646 = vrot.lane.b32.xlu0 %v407, 12
      %v647 = vpop.permute.xlu0 %646
      %648 = vrot.lane.b32.xlu0 %v409, 12
      %v649 = vpop.permute.xlu0 %648
      %650 = vrot.lane.b32.xlu0 %v412, 12
      %v651 = vpop.permute.xlu0 %650
      %652 = vrot.lane.b32.xlu0 %v414, 12
      %v653 = vpop.permute.xlu0 %652
      %654 = vrot.lane.b32.xlu0 %v461, 12
      %v655 = vpop.permute.xlu0 %654
      %656 = vrot.lane.b32.xlu0 %v463, 12
      %v657 = vpop.permute.xlu0 %656
      %674 = vrot.lane.b32.xlu0 %v423, 15
      %v675 = vpop.permute.xlu0 %674
      %676 = vrot.lane.b32.xlu0 %v425, 15
      %v677 = vpop.permute.xlu0 %676
      %678 = vrot.lane.b32.xlu0 %v428, 15
      %v679 = vpop.permute.xlu0 %678
      %680 = vrot.lane.b32.xlu0 %v430, 15
      %v681 = vpop.permute.xlu0 %680
      %682 = vrot.lane.b32.xlu0 %v433, 15
      %v683 = vpop.permute.xlu0 %682
      %684 = vrot.lane.b32.xlu0 %v435, 15
      %v685 = vpop.permute.xlu0 %684
      %686 = vrot.lane.b32.xlu0 %v438, 15
      %v687 = vpop.permute.xlu0 %686
      %688 = vrot.lane.b32.xlu0 %v440, 15
      %v689 = vpop.permute.xlu0 %688
      %690 = vrot.lane.b32.xlu0 %v443, 15
      %v691 = vpop.permute.xlu0 %690
      %692 = vrot.lane.b32.xlu0 %v445, 15
      %v693 = vpop.permute.xlu0 %692
      %694 = vrot.lane.b32.xlu0 %v448, 15
      %v695 = vpop.permute.xlu0 %694
      %696 = vrot.lane.b32.xlu0 %v450, 15
      %v697 = vpop.permute.xlu0 %696
      %698 = vrot.lane.b32.xlu0 %v453, 15
      %v699 = vpop.permute.xlu0 %698
      %700 = vrot.lane.b32.xlu0 %v455, 15
      %v701 = vpop.permute.xlu0 %700
      %702 = vrot.lane.b32.xlu0 %v466, 15
      %v703 = vpop.permute.xlu0 %702
      %704 = vrot.lane.b32.xlu0 %v468, 15
      %v705 = vpop.permute.xlu0 %704
      %722 = vrot.lane.b32.xlu0 %v326, 18
      %v723 = vpop.permute.xlu0 %722
      %724 = vrot.lane.b32.xlu0 %v327, 18
      %v725 = vpop.permute.xlu0 %724
      %726 = vrot.lane.b32.xlu0 %v329, 18
      %v727 = vpop.permute.xlu0 %726
      %728 = vrot.lane.b32.xlu0 %v330, 18
      %v729 = vpop.permute.xlu0 %728
      %730 = vrot.lane.b32.xlu0 %v332, 18
      %v731 = vpop.permute.xlu0 %730
      %732 = vrot.lane.b32.xlu0 %v333, 18
      %v733 = vpop.permute.xlu0 %732
      %734 = vrot.lane.b32.xlu0 %v335, 18
      %v735 = vpop.permute.xlu0 %734
      %736 = vrot.lane.b32.xlu0 %v336, 18
      %v737 = vpop.permute.xlu0 %736
      %738 = vrot.lane.b32.xlu0 %v338, 18
      %v739 = vpop.permute.xlu0 %738
      %740 = vrot.lane.b32.xlu0 %v339, 18
      %v741 = vpop.permute.xlu0 %740
      %742 = vrot.lane.b32.xlu0 %v341, 18
      %v743 = vpop.permute.xlu0 %742
      %744 = vrot.lane.b32.xlu0 %v342, 18
      %v745 = vpop.permute.xlu0 %744
      %746 = vrot.lane.b32.xlu0 %v344, 18
      %v747 = vpop.permute.xlu0 %746
      %748 = vrot.lane.b32.xlu0 %v345, 18
      %v749 = vpop.permute.xlu0 %748
      %750 = vrot.lane.b32.xlu0 %v347, 18
      %v751 = vpop.permute.xlu0 %750
      %752 = vrot.lane.b32.xlu0 %v348, 18
      %v753 = vpop.permute.xlu0 %752
      %770 = vrot.lane.b32.xlu0 %v387, 21
      %v771 = vpop.permute.xlu0 %770
      %772 = vrot.lane.b32.xlu0 %v389, 21
      %v773 = vpop.permute.xlu0 %772
      %774 = vrot.lane.b32.xlu0 %v392, 21
      %v775 = vpop.permute.xlu0 %774
      %776 = vrot.lane.b32.xlu0 %v394, 21
      %v777 = vpop.permute.xlu0 %776
      %778 = vrot.lane.b32.xlu0 %v397, 21
      %v779 = vpop.permute.xlu0 %778
      %780 = vrot.lane.b32.xlu0 %v399, 21
      %v781 = vpop.permute.xlu0 %780
      %782 = vrot.lane.b32.xlu0 %v402, 21
      %v783 = vpop.permute.xlu0 %782
      %784 = vrot.lane.b32.xlu0 %v404, 21
      %v785 = vpop.permute.xlu0 %784
      %786 = vrot.lane.b32.xlu0 %v407, 21
      %v787 = vpop.permute.xlu0 %786
      %788 = vrot.lane.b32.xlu0 %v409, 21
      %v789 = vpop.permute.xlu0 %788
      %790 = vrot.lane.b32.xlu0 %v412, 21
      %v791 = vpop.permute.xlu0 %790
      %792 = vrot.lane.b32.xlu0 %v414, 21
      %v793 = vpop.permute.xlu0 %792
      %794 = vrot.lane.b32.xlu0 %v461, 21
      %v795 = vpop.permute.xlu0 %794
      %796 = vrot.lane.b32.xlu0 %v463, 21
      %v797 = vpop.permute.xlu0 %796
      %798 = vrot.lane.b32.xlu0 %v474, 21
      %v799 = vpop.permute.xlu0 %798
      %800 = vrot.lane.b32.xlu0 %v476, 21
      %v801 = vpop.permute.xlu0 %800
      %818 = vrot.lane.b32.xlu0 %v428, 24
      %v819 = vpop.permute.xlu0 %818
      %820 = vrot.lane.b32.xlu0 %v430, 24
      %v821 = vpop.permute.xlu0 %820
      %822 = vrot.lane.b32.xlu0 %v433, 24
      %v823 = vpop.permute.xlu0 %822
      %824 = vrot.lane.b32.xlu0 %v435, 24
      %v825 = vpop.permute.xlu0 %824
      %826 = vrot.lane.b32.xlu0 %v438, 24
      %v827 = vpop.permute.xlu0 %826
      %828 = vrot.lane.b32.xlu0 %v440, 24
      %v829 = vpop.permute.xlu0 %828
      %830 = vrot.lane.b32.xlu0 %v443, 24
      %v831 = vpop.permute.xlu0 %830
      %832 = vrot.lane.b32.xlu0 %v445, 24
      %v833 = vpop.permute.xlu0 %832
      %834 = vrot.lane.b32.xlu0 %v448, 24
      %v835 = vpop.permute.xlu0 %834
      %836 = vrot.lane.b32.xlu0 %v450, 24
      %v837 = vpop.permute.xlu0 %836
      %838 = vrot.lane.b32.xlu0 %v453, 24
      %v839 = vpop.permute.xlu0 %838
      %840 = vrot.lane.b32.xlu0 %v455, 24
      %v841 = vpop.permute.xlu0 %840
      %842 = vrot.lane.b32.xlu0 %v466, 24
      %v843 = vpop.permute.xlu0 %842
      %844 = vrot.lane.b32.xlu0 %v468, 24
      %v845 = vpop.permute.xlu0 %844
      %846 = vrot.lane.b32.xlu0 %v479, 24
      %v847 = vpop.permute.xlu0 %846
      %848 = vrot.lane.b32.xlu0 %v481, 24
      %v849 = vpop.permute.xlu0 %848
      %vm866 = vcmask 23552
      %v867 = vsel %vm866, %v320, %v483
      %v868 = vsel %vm866, %v321, %v485
      %v869 = vsel %vm866, %v323, %v487
      %v870 = vsel %vm866, %v324, %v489
      %v871 = vsel %vm866, %v326, %v491
      %v872 = vsel %vm866, %v327, %v493
      %v873 = vsel %vm866, %v329, %v495
      %v874 = vsel %vm866, %v330, %v497
      %v875 = vsel %vm866, %v332, %v499
      %v876 = vsel %vm866, %v333, %v501
      %v877 = vsel %vm866, %v335, %v503
      %v878 = vsel %vm866, %v336, %v505
      %v879 = vsel %vm866, %v338, %v507
      %v880 = vsel %vm866, %v339, %v509
      %v881 = vsel %vm866, %v341, %v511
      %v882 = vsel %vm866, %v342, %v513
      %vm883 = vcmask 48128
      %v884 = vsel %vm883, %v867, %v531
      %v885 = vsel %vm883, %v868, %v533
      %v886 = vsel %vm883, %v869, %v535
      %v887 = vsel %vm883, %v870, %v537
      %v888 = vsel %vm883, %v871, %v539
      %v889 = vsel %vm883, %v872, %v541
      %v890 = vsel %vm883, %v873, %v543
      %v891 = vsel %vm883, %v874, %v545
      %v892 = vsel %vm883, %v875, %v547
      %v893 = vsel %vm883, %v876, %v549
      %v894 = vsel %vm883, %v877, %v551
      %v895 = vsel %vm883, %v878, %v553
      %v896 = vsel %vm883, %v879, %v555
      %v897 = vsel %vm883, %v880, %v557
      %v898 = vsel %vm883, %v881, %v559
      %v899 = vsel %vm883, %v882, %v561
      %vm900 = vcmask 72704
      %v901 = vsel %vm900, %v884, %v579
      %v902 = vsel %vm900, %v885, %v581
      %v903 = vsel %vm900, %v886, %v583
      %v904 = vsel %vm900, %v887, %v585
      %v905 = vsel %vm900, %v888, %v587
      %v906 = vsel %vm900, %v889, %v589
      %v907 = vsel %vm900, %v890, %v591
      %v908 = vsel %vm900, %v891, %v593
      %v909 = vsel %vm900, %v892, %v595
      %v910 = vsel %vm900, %v893, %v597
      %v911 = vsel %vm900, %v894, %v599
      %v912 = vsel %vm900, %v895, %v601
      %v913 = vsel %vm900, %v896, %v603
      %v914 = vsel %vm900, %v897, %v605
      %v915 = vsel %vm900, %v898, %v607
      %v916 = vsel %vm900, %v899, %v609
      %vm917 = vcmask 97280
      %v918 = vsel %vm917, %v901, %v627
      %v919 = vsel %vm917, %v902, %v629
      %v920 = vsel %vm917, %v903, %v631
      %v921 = vsel %vm917, %v904, %v633
      %v922 = vsel %vm917, %v905, %v635
      %v923 = vsel %vm917, %v906, %v637
      %v924 = vsel %vm917, %v907, %v639
      %v925 = vsel %vm917, %v908, %v641
      %v926 = vsel %vm917, %v909, %v643
      %v927 = vsel %vm917, %v910, %v645
      %v928 = vsel %vm917, %v911, %v647
      %v929 = vsel %vm917, %v912, %v649
      %v930 = vsel %vm917, %v913, %v651
      %v931 = vsel %vm917, %v914, %v653
      %v932 = vsel %vm917, %v915, %v655
      %v933 = vsel %vm917, %v916, %v657
      %vm934 = vcmask 121856
      %v935 = vsel %vm934, %v918, %v675
      %v936 = vsel %vm934, %v919, %v677
      %v937 = vsel %vm934, %v920, %v679
      %v938 = vsel %vm934, %v921, %v681
      %v939 = vsel %vm934, %v922, %v683
      %v940 = vsel %vm934, %v923, %v685
      %v941 = vsel %vm934, %v924, %v687
      %v942 = vsel %vm934, %v925, %v689
      %v943 = vsel %vm934, %v926, %v691
      %v944 = vsel %vm934, %v927, %v693
      %v945 = vsel %vm934, %v928, %v695
      %v946 = vsel %vm934, %v929, %v697
      %v947 = vsel %vm934, %v930, %v699
      %v948 = vsel %vm934, %v931, %v701
      %v949 = vsel %vm934, %v932, %v703
      %v950 = vsel %vm934, %v933, %v705
      %vm951 = vcmask 146432
      %v952 = vsel %vm951, %v935, %v723
      %v953 = vsel %vm951, %v936, %v725
      %v954 = vsel %vm951, %v937, %v727
      %v955 = vsel %vm951, %v938, %v729
      %v956 = vsel %vm951, %v939, %v731
      %v957 = vsel %vm951, %v940, %v733
      %v958 = vsel %vm951, %v941, %v735
      %v959 = vsel %vm951, %v942, %v737
      %v960 = vsel %vm951, %v943, %v739
      %v961 = vsel %vm951, %v944, %v741
      %v962 = vsel %vm951, %v945, %v743
      %v963 = vsel %vm951, %v946, %v745
      %v964 = vsel %vm951, %v947, %v747
      %v965 = vsel %vm951, %v948, %v749
      %v966 = vsel %vm951, %v949, %v751
      %v967 = vsel %vm951, %v950, %v753
      %vm968 = vcmask 171008
      %v969 = vsel %vm968, %v952, %v771
      %v970 = vsel %vm968, %v953, %v773
      %v971 = vsel %vm968, %v954, %v775
      %v972 = vsel %vm968, %v955, %v777
      %v973 = vsel %vm968, %v956, %v779
      %v974 = vsel %vm968, %v957, %v781
      %v975 = vsel %vm968, %v958, %v783
      %v976 = vsel %vm968, %v959, %v785
      %v977 = vsel %vm968, %v960, %v787
      %v978 = vsel %vm968, %v961, %v789
      %v979 = vsel %vm968, %v962, %v791
      %v980 = vsel %vm968, %v963, %v793
      %v981 = vsel %vm968, %v964, %v795
      %v982 = vsel %vm968, %v965, %v797
      %v983 = vsel %vm968, %v966, %v799
      %v984 = vsel %vm968, %v967, %v801
      %vm985 = vcmask 195584
      %v986 = vsel %vm985, %v969, %v819
      %v987 = vsel %vm985, %v970, %v821
      %v988 = vsel %vm985, %v971, %v823
      %v989 = vsel %vm985, %v972, %v825
      %v990 = vsel %vm985, %v973, %v827
      %v991 = vsel %vm985, %v974, %v829
      %v992 = vsel %vm985, %v975, %v831
      %v993 = vsel %vm985, %v976, %v833
      %v994 = vsel %vm985, %v977, %v835
      %v995 = vsel %vm985, %v978, %v837
      %v996 = vsel %vm985, %v979, %v839
      %v997 = vsel %vm985, %v980, %v841
      %v998 = vsel %vm985, %v981, %v843
      %v999 = vsel %vm985, %v982, %v845
      %v1000 = vsel %vm985, %v983, %v847
      %v1001 = vsel %vm985, %v984, %v849
      %v1002 = vpack.c.bf16 %v987, %v986
      %v1003 = vpack.c.bf16 %v989, %v988
      %v1004 = vpack.c.bf16 %v991, %v990
      %v1005 = vpack.c.bf16 %v993, %v992
      %v1006 = vpack.c.bf16 %v995, %v994
      %v1007 = vpack.c.bf16 %v997, %v996
      %v1008 = vpack.c.bf16 %v999, %v998
      %v1009 = vpack.c.bf16 %v1001, %v1000
      %v1010 = vld [vmem:[%s1] sm:$0xf]
      %v1011 = vld [vmem:[%s1 + $0x4] sm:$0xf]
      %v1012 = vld [vmem:[%s1 + $0x8] sm:$0xf]
      %v1013 = vld [vmem:[%s1 + $0xc] sm:$0x3]
      %v1014 = vld [vmem:[%s2] sm:$0x1]
      %v1016 = vlaneseq
      %v1017 = vshrl.u32 %v1016, 7
      %v1018 = vsub.s32 0, %v1017
      %v1019 = vrot.slane %v1014, %v1018
      %v1025 = vunpack.c.l.b16 %v1010
      %v1026 = vunpack.c.l.b16 %v1011
      %v1027 = vunpack.c.l.b16 %v1012
      %v1028 = vunpack.c.l.b16 %v1013
      %v1029 = vpack.c.b16 %v1026, %v1025
      %v1030 = vpack.c.b16 %v1028, %v1027
      %vm1032 = vcmask 220160
      %v1034 = vsel %vm1032, %v1002, 0
      %v1037 = vsel %vm1032, %v1003, 0
      %v1040 = vsel %vm1032, %v1004, 0
      %v1043 = vsel %vm1032, %v1005, 0
      %v1046 = vsel %vm1032, %v1006, 0
      %v1049 = vsel %vm1032, %v1007, 0
      %v1052 = vsel %vm1032, %v1008, 0
      %v1055 = vsel %vm1032, %v1009, 0
      %vm1057 = vcmask 1044480
      %v1058 = vsel %vm1057, 4294967295, 65535
      %v1059 = vsel %vm415, %v1058, 0
      %v1061 = vand.u32 %v1030, %v1059
      %1063 = vmatprep.subr.bf16.mxu0 0
      %1064 = vmatpush1.bf16.msra.mxu0 %v1029
      %1065 = vmatprep.subr.bf16.mxu0 0
      %1066 = vmatpush1.bf16.msra.mxu0 %v1061
      %1067 = vmatprep.subr.bf16.mxu0 0
      %1068 = vmatpush1.bf16.msra.mxu0 0
      %1069 = vmatprep.subr.bf16.mxu0 0
      %1070 = vmatpush1.bf16.msra.mxu0 0
      %1071 = vmatprep.subr.bf16.mxu0 0
      %1072 = vmatpush1.bf16.msra.mxu0 0
      %1073 = vmatprep.subr.bf16.mxu0 0
      %1074 = vmatpush1.bf16.msra.mxu0 0
      %1075 = vmatprep.subr.bf16.mxu0 0
      %1076 = vmatpush1.bf16.msra.mxu0 0
      %1077 = vmatprep.subr.bf16.mxu0 0
      %1078 = vmatpush1.bf16.msra.mxu0 0
      %1079 = vmatprep.subr.bf16.mxu0 0
      %1080 = vmatpush1.bf16.msra.mxu0 0
      %1081 = vmatprep.subr.bf16.mxu0 0
      %1082 = vmatpush1.bf16.msra.mxu0 0
      %1083 = vmatprep.subr.bf16.mxu0 0
      %1084 = vmatpush1.bf16.msra.mxu0 0
      %1085 = vmatprep.subr.bf16.mxu0 0
      %1086 = vmatpush1.bf16.msra.mxu0 0
      %1087 = vmatprep.subr.bf16.mxu0 0
      %1088 = vmatpush1.bf16.msra.mxu0 0
      %1089 = vmatprep.subr.bf16.mxu0 0
      %1090 = vmatpush1.bf16.msra.mxu0 0
      %1091 = vmatprep.subr.bf16.mxu0 0
      %1092 = vmatpush1.bf16.msra.mxu0 0
      %1093 = vmatprep.subr.bf16.mxu0 0
      %1094 = vmatpush1.bf16.msra.mxu0 0
      %1095 = vmatprep.mubr.bf16.mxu0 0
      %1096 = vmatmul.mubr.bf16.gmra.mrb[0].mxu0 %v1034
      %v1097 = vpop.f32.mrb[0].mxu0
      %v1098 = vadd.f32 %v1019, %v1097
      %v1099 = vpop.f32.mrb[0].mxu0
      %v1100 = vpop.f32.mrb[0].mxu0
      %v1101 = vadd.f32 %v1019, %v1100
      %v1102 = vpop.f32.mrb[0].mxu0
      %1103 = vmatprep.mubr.bf16.mxu0 0
      %1104 = vmatmul.mubr.bf16.gmra.mrb[0].mxu0 %v1037
      %v1105 = vpop.f32.mrb[0].mxu0
      %v1106 = vadd.f32 %v1019, %v1105
      %v1107 = vpop.f32.mrb[0].mxu0
      %v1108 = vpop.f32.mrb[0].mxu0
      %v1109 = vadd.f32 %v1019, %v1108
      %v1110 = vpop.f32.mrb[0].mxu0
      %1111 = vmatprep.mubr.bf16.mxu0 0
      %1112 = vmatmul.mubr.bf16.gmra.mrb[0].mxu0 %v1040
      %v1113 = vpop.f32.mrb[0].mxu0
      %v1114 = vadd.f32 %v1019, %v1113
      %v1115 = vpop.f32.mrb[0].mxu0
      %v1116 = vpop.f32.mrb[0].mxu0
      %v1117 = vadd.f32 %v1019, %v1116
      %v1118 = vpop.f32.mrb[0].mxu0
      %1119 = vmatprep.mubr.bf16.mxu0 0
      %1120 = vmatmul.mubr.bf16.gmra.mrb[0].mxu0 %v1043
      %v1121 = vpop.f32.mrb[0].mxu0
      %v1122 = vadd.f32 %v1019, %v1121
      %v1123 = vpop.f32.mrb[0].mxu0
      %v1124 = vpop.f32.mrb[0].mxu0
      %v1125 = vadd.f32 %v1019, %v1124
      %v1126 = vpop.f32.mrb[0].mxu0
      %1127 = vmatprep.mubr.bf16.mxu0 0
      %1128 = vmatmul.mubr.bf16.gmra.mrb[0].mxu0 %v1046
      %v1129 = vpop.f32.mrb[0].mxu0
      %v1130 = vadd.f32 %v1019, %v1129
      %v1131 = vpop.f32.mrb[0].mxu0
      %v1132 = vpop.f32.mrb[0].mxu0
      %v1133 = vadd.f32 %v1019, %v1132
      %v1134 = vpop.f32.mrb[0].mxu0
      %1135 = vmatprep.mubr.bf16.mxu0 0
      %1136 = vmatmul.mubr.bf16.gmra.mrb[0].mxu0 %v1049
      %v1137 = vpop.f32.mrb[0].mxu0
      %v1138 = vadd.f32 %v1019, %v1137
      %v1139 = vpop.f32.mrb[0].mxu0
      %v1140 = vpop.f32.mrb[0].mxu0
      %v1141 = vadd.f32 %v1019, %v1140
      %v1142 = vpop.f32.mrb[0].mxu0
      %1143 = vmatprep.mubr.bf16.mxu0 0
      %1144 = vmatmul.mubr.bf16.gmra.mrb[0].mxu0 %v1052
      %v1145 = vpop.f32.mrb[0].mxu0
      %v1146 = vadd.f32 %v1019, %v1145
      %v1147 = vpop.f32.mrb[0].mxu0
      %v1148 = vpop.f32.mrb[0].mxu0
      %v1149 = vadd.f32 %v1019, %v1148
      %v1150 = vpop.f32.mrb[0].mxu0
      %1151 = vmatprep.mubr.bf16.mxu0 0
      %1152 = vmatmul.mubr.bf16.gmra.mrb[0].mxu0 %v1055
      %v1153 = vpop.f32.mrb[0].mxu0
      %v1154 = vadd.f32 %v1019, %v1153
      %v1155 = vpop.f32.mrb[0].mxu0
      %v1156 = vpop.f32.mrb[0].mxu0
      %v1157 = vadd.f32 %v1019, %v1156
      %v1158 = vpop.f32.mrb[0].mxu0
      %1159 = vdwg.mxu0
      %v1160 = vmax.f32 %v1098, 0.0
      %v1161 = vmax.f32 %v1101, 0.0
      %v1162 = vmax.f32 %v1106, 0.0
      %v1163 = vmax.f32 %v1109, 0.0
      %v1164 = vmax.f32 %v1114, 0.0
      %v1165 = vmax.f32 %v1117, 0.0
      %v1166 = vmax.f32 %v1122, 0.0
      %v1167 = vmax.f32 %v1125, 0.0
      %v1168 = vmax.f32 %v1130, 0.0
      %v1169 = vmax.f32 %v1133, 0.0
      %v1170 = vmax.f32 %v1138, 0.0
      %v1171 = vmax.f32 %v1141, 0.0
      %v1172 = vmax.f32 %v1146, 0.0
      %v1173 = vmax.f32 %v1149, 0.0
      %v1174 = vmax.f32 %v1154, 0.0
      %v1175 = vmax.f32 %v1157, 0.0
      %v1176 = vadd.f32 %v1160, %v1162
      %v1177 = vadd.f32 %v1176, %v1164
      %v1178 = vadd.f32 %v1177, %v1166
      %v1179 = vadd.f32 %v1178, %v1168
      %v1180 = vadd.f32 %v1179, %v1170
      %v1181 = vadd.f32 %v1180, %v1172
      %v1182 = vadd.f32 %v1181, %v1174
      %v1183 = vadd.f32 %v1161, %v1163
      %v1184 = vadd.f32 %v1183, %v1165
      %v1185 = vadd.f32 %v1184, %v1167
      %v1186 = vadd.f32 %v1185, %v1169
      %v1187 = vadd.f32 %v1186, %v1171
      %v1188 = vadd.f32 %v1187, %v1173
      %v1189 = vadd.f32 %v1188, %v1175
      %v1190 = vrcp.pop 8.0
      %v1191 = vmul.f32 %v1182, %v1190
      %v1192 = vmul.f32 %v1189, %v1190
      %v1193 = vpack.c.bf16 %v1192, %v1191
      %v1194 = vld [vmem:[%s3] sm:$0xf]
      %v1195 = vld [vmem:[%s3 + $0x4] sm:$0xf]
      %v1196 = vld [vmem:[%s3 + $0x8] sm:$0xf]
      %v1197 = vld [vmem:[%s3 + $0xc] sm:$0xf]
      %v1198 = vld [vmem:[%s3 + $0x10] sm:$0xf]
      %v1199 = vld [vmem:[%s3 + $0x14] sm:$0xf]
      %v1200 = vld [vmem:[%s3 + $0x18] sm:$0xf]
      %v1201 = vld [vmem:[%s3 + $0x1c] sm:$0xf]
      %v1202 = vld [vmem:[%s3 + $0x20] sm:$0xf]
      %v1203 = vld [vmem:[%s3 + $0x24] sm:$0xf]
      %v1204 = vld [vmem:[%s3 + $0x28] sm:$0xf]
      %v1205 = vld [vmem:[%s3 + $0x2c] sm:$0xf]
      %v1206 = vld [vmem:[%s3 + $0x30] sm:$0xf]
      %v1207 = vld [vmem:[%s3 + $0x34] sm:$0xf]
      %v1208 = vld [vmem:[%s3 + $0x38] sm:$0xf]
      %v1209 = vld [vmem:[%s3 + $0x3c] sm:$0xf]
      %v1210 = vld [vmem:[%s4] sm:$0x1]
      %v1212 = vlaneseq
      %v1213 = vshrl.u32 %v1212, 7
      %v1214 = vsub.s32 0, %v1213
      %v1215 = vrot.slane %v1210, %v1214
      %v1233 = vunpack.c.l.b16 %v1194
      %v1234 = vunpack.c.l.b16 %v1195
      %v1235 = vunpack.c.l.b16 %v1196
      %v1236 = vunpack.c.l.b16 %v1197
      %v1237 = vunpack.c.l.b16 %v1198
      %v1238 = vunpack.c.l.b16 %v1199
      %v1239 = vunpack.c.l.b16 %v1200
      %v1240 = vunpack.c.l.b16 %v1201
      %v1241 = vunpack.c.l.b16 %v1202
      %v1242 = vunpack.c.l.b16 %v1203
      %v1243 = vunpack.c.l.b16 %v1204
      %v1244 = vunpack.c.l.b16 %v1205
      %v1245 = vunpack.c.l.b16 %v1206
      %v1246 = vunpack.c.l.b16 %v1207
      %v1247 = vunpack.c.l.b16 %v1208
      %v1248 = vunpack.c.l.b16 %v1209
      %v1249 = vpack.c.b16 %v1234, %v1233
      %v1250 = vpack.c.b16 %v1236, %v1235
      %v1251 = vpack.c.b16 %v1238, %v1237
      %v1252 = vpack.c.b16 %v1240, %v1239
      %v1253 = vpack.c.b16 %v1242, %v1241
      %v1254 = vpack.c.b16 %v1244, %v1243
      %v1255 = vpack.c.b16 %v1246, %v1245
      %v1256 = vpack.c.b16 %v1248, %v1247
      %1265 = vmatprep.subr.bf16.mxu0 0
      %1266 = vmatpush1.bf16.msra.mxu0 %v1249
      %1267 = vmatprep.subr.bf16.mxu0 0
      %1268 = vmatpush1.bf16.msra.mxu0 %v1250
      %1269 = vmatprep.subr.bf16.mxu0 0
      %1270 = vmatpush1.bf16.msra.mxu0 %v1251
      %1271 = vmatprep.subr.bf16.mxu0 0
      %1272 = vmatpush1.bf16.msra.mxu0 %v1252
      %1273 = vmatprep.subr.bf16.mxu0 0
      %1274 = vmatpush1.bf16.msra.mxu0 %v1253
      %1275 = vmatprep.subr.bf16.mxu0 0
      %1276 = vmatpush1.bf16.msra.mxu0 %v1254
      %1277 = vmatprep.subr.bf16.mxu0 0
      %1278 = vmatpush1.bf16.msra.mxu0 %v1255
      %1279 = vmatprep.subr.bf16.mxu0 0
      %1280 = vmatpush1.bf16.msra.mxu0 %v1256
      %1281 = vmatprep.subr.bf16.mxu0 0
      %1282 = vmatpush1.bf16.msra.mxu0 0
      %1283 = vmatprep.subr.bf16.mxu0 0
      %1284 = vmatpush1.bf16.msra.mxu0 0
      %1285 = vmatprep.subr.bf16.mxu0 0
      %1286 = vmatpush1.bf16.msra.mxu0 0
      %1287 = vmatprep.subr.bf16.mxu0 0
      %1288 = vmatpush1.bf16.msra.mxu0 0
      %1289 = vmatprep.subr.bf16.mxu0 0
      %1290 = vmatpush1.bf16.msra.mxu0 0
      %1291 = vmatprep.subr.bf16.mxu0 0
      %1292 = vmatpush1.bf16.msra.mxu0 0
      %1293 = vmatprep.subr.bf16.mxu0 0
      %1294 = vmatpush1.bf16.msra.mxu0 0
      %1295 = vmatprep.subr.bf16.mxu0 0
      %1296 = vmatpush1.bf16.msra.mxu0 0
      %1297 = vmatprep.mubr.bf16.mxu0 0
      %1298 = vmatmul.mubr.bf16.gmra.mrb[0].mxu0 %v1193
      %v1299 = vpop.f32.mrb[0].mxu0
      %v1300 = vadd.f32 %v1215, %v1299
      %v1301 = vpop.f32.mrb[0].mxu0
      %v1302 = vpop.f32.mrb[0].mxu0
      %v1303 = vadd.f32 %v1215, %v1302
      %v1304 = vpop.f32.mrb[0].mxu0
      %1305 = vdwg.mxu0
      %v1306 = vpack.c.bf16 %v1303, %v1300
      %v1307 = vld [vmem:[%s5] sm:$0xf]
      %v1308 = vld [vmem:[%s5 + $0x4] sm:$0xf]
      %v1309 = vld [vmem:[%s5 + $0x8] sm:$0xf]
      %v1310 = vld [vmem:[%s5 + $0xc] sm:$0xf]
      %v1311 = vld [vmem:[%s5 + $0x10] sm:$0xf]
      %v1312 = vld [vmem:[%s5 + $0x14] sm:$0xf]
      %v1313 = vld [vmem:[%s5 + $0x18] sm:$0xf]
      %v1314 = vld [vmem:[%s5 + $0x1c] sm:$0xf]
      %v1315 = vld [vmem:[%s5 + $0x20] sm:$0xf]
      %v1316 = vld [vmem:[%s5 + $0x24] sm:$0xf]
      %v1317 = vld [vmem:[%s5 + $0x28] sm:$0xf]
      %v1318 = vld [vmem:[%s5 + $0x2c] sm:$0xf]
      %v1319 = vld [vmem:[%s5 + $0x30] sm:$0xf]
      %v1320 = vld [vmem:[%s5 + $0x34] sm:$0xf]
      %v1321 = vld [vmem:[%s5 + $0x38] sm:$0xf]
      %v1322 = vld [vmem:[%s5 + $0x3c] sm:$0xf]
      %v1323 = vld [vmem:[%s6] sm:$0x1]
      %v1325 = vlaneseq
      %v1326 = vshrl.u32 %v1325, 7
      %v1327 = vsub.s32 0, %v1326
      %v1328 = vrot.slane %v1323, %v1327
      %v1346 = vunpack.c.l.b16 %v1307
      %v1347 = vunpack.c.l.b16 %v1308
      %v1348 = vunpack.c.l.b16 %v1309
      %v1349 = vunpack.c.l.b16 %v1310
      %v1350 = vunpack.c.l.b16 %v1311
      %v1351 = vunpack.c.l.b16 %v1312
      %v1352 = vunpack.c.l.b16 %v1313
      %v1353 = vunpack.c.l.b16 %v1314
      %v1354 = vunpack.c.l.b16 %v1315
      %v1355 = vunpack.c.l.b16 %v1316
      %v1356 = vunpack.c.l.b16 %v1317
      %v1357 = vunpack.c.l.b16 %v1318
      %v1358 = vunpack.c.l.b16 %v1319
      %v1359 = vunpack.c.l.b16 %v1320
      %v1360 = vunpack.c.l.b16 %v1321
      %v1361 = vunpack.c.l.b16 %v1322
      %v1362 = vpack.c.b16 %v1347, %v1346
      %v1363 = vpack.c.b16 %v1349, %v1348
      %v1364 = vpack.c.b16 %v1351, %v1350
      %v1365 = vpack.c.b16 %v1353, %v1352
      %v1366 = vpack.c.b16 %v1355, %v1354
      %v1367 = vpack.c.b16 %v1357, %v1356
      %v1368 = vpack.c.b16 %v1359, %v1358
      %v1369 = vpack.c.b16 %v1361, %v1360
      %1378 = vmatprep.subr.bf16.mxu0 0
      %1379 = vmatpush1.bf16.msra.mxu0 %v1362
      %1380 = vmatprep.subr.bf16.mxu0 0
      %1381 = vmatpush1.bf16.msra.mxu0 %v1363
      %1382 = vmatprep.subr.bf16.mxu0 0
      %1383 = vmatpush1.bf16.msra.mxu0 %v1364
      %1384 = vmatprep.subr.bf16.mxu0 0
      %1385 = vmatpush1.bf16.msra.mxu0 %v1365
      %1386 = vmatprep.subr.bf16.mxu0 0
      %1387 = vmatpush1.bf16.msra.mxu0 %v1366
      %1388 = vmatprep.subr.bf16.mxu0 0
      %1389 = vmatpush1.bf16.msra.mxu0 %v1367
      %1390 = vmatprep.subr.bf16.mxu0 0
      %1391 = vmatpush1.bf16.msra.mxu0 %v1368
      %1392 = vmatprep.subr.bf16.mxu0 0
      %1393 = vmatpush1.bf16.msra.mxu0 %v1369
      %1394 = vmatprep.subr.bf16.mxu0 0
      %1395 = vmatpush1.bf16.msra.mxu0 0
      %1396 = vmatprep.subr.bf16.mxu0 0
      %1397 = vmatpush1.bf16.msra.mxu0 0
      %1398 = vmatprep.subr.bf16.mxu0 0
      %1399 = vmatpush1.bf16.msra.mxu0 0
      %1400 = vmatprep.subr.bf16.mxu0 0
      %1401 = vmatpush1.bf16.msra.mxu0 0
      %1402 = vmatprep.subr.bf16.mxu0 0
      %1403 = vmatpush1.bf16.msra.mxu0 0
      %1404 = vmatprep.subr.bf16.mxu0 0
      %1405 = vmatpush1.bf16.msra.mxu0 0
      %1406 = vmatprep.subr.bf16.mxu0 0
      %1407 = vmatpush1.bf16.msra.mxu0 0
      %1408 = vmatprep.subr.bf16.mxu0 0
      %1409 = vmatpush1.bf16.msra.mxu0 0
      %1410 = vmatprep.mubr.bf16.mxu0 0
      %1411 = vmatmul.mubr.bf16.gmra.mrb[0].mxu0 %v1306
      %v1412 = vpop.f32.mrb[0].mxu0
      %v1413 = vadd.f32 %v1328, %v1412
      %v1414 = vpop.f32.mrb[0].mxu0
      %v1415 = vpop.f32.mrb[0].mxu0
      %v1416 = vadd.f32 %v1328, %v1415
      %v1417 = vpop.f32.mrb[0].mxu0
      %1418 = vdwg.mxu0
      %v1420 = vunpack.c.l.b16 %v1306
      %v1421 = vunpack.c.h.b16 %v1306
      %v1422 = vpack.c.b16 %v1420, %v1420
      %v1423 = vpack.c.b16 %v1421, %v1421
      %1426 = vst [vmem:[%s313] sm:$0xf] %v1422
      %1427 = vst [vmem:[%s313 + $0x4] sm:$0xf] %v1423
      %v1428 = vpack.c.bf16 %v1416, %v1413
      %v1430 = vunpack.c.l.b16 %v1428
      %v1431 = vunpack.c.h.b16 %v1428
      %v1432 = vpack.c.b16 %v1430, %v1430
      %v1433 = vpack.c.b16 %v1431, %v1431
      %1436 = vst [vmem:[%s318] sm:$0xf] %v1432
      %1437 = vst [vmem:[%s318 + $0x4] sm:$0xf] %v1433
      %p1438 = scmp.lt.s32.totalorder %s20, 1
      %s1439 = scalar_select %p1438, %s20, 1
      %s1440 = smul.addr %s1439, 2
      %s1441 = smul.addr %s1440, 4
      %s1442 = scalar_lea.vmem %s7, %s1441
      %p1443 = scmp.lt.s32.totalorder %s20, 1
      %s1444 = scalar_select %p1443, %s20, 1
      %s1445 = smul.addr %s1444, 2
      %s1446 = smul.addr %s1445, 4
      %s1447 = scalar_lea.vmem %s8, %s1446
      // Predicated region
      $region49: #{model_forward.2} parent=47 // pred_check
        %p1448 = pneg %p190
      $region50: #{model_forward.2} parent=47 // pred_check_branch
        %1450 = sbr.rel (%p1448) target = $region52
      $region51: #{model_forward.2} parent=47 // pred_region
        _
      $region52: #{model_forward.2} parent=47 // pred_fallthru
        _
      // Predicated region
      $region53: #{model_forward.2} parent=47 // pred_check
        %p1451 = pneg %p216
      $region54: #{model_forward.2} parent=47 // pred_check_branch
        %1453 = sbr.rel (%p1451) target = $region56
      $region55: #{model_forward.2} parent=47 // pred_region
        _
      $region56: #{model_forward.2} parent=47 // pred_fallthru
        _
    $region48: #{model_forward.2} parent=5 // pred_fallthru
      _
    %p1454 = scmp.le.s32.totalorder 2, %s15
    // Predicated region
    $region57: #{model_forward.2} parent=5 // pred_check
      %p1455 = pneg %p1454
    $region58: #{model_forward.2} parent=5 // pred_check_branch
      %1457 = sbr.rel (%p1455) target = $region60
    $region59: #{model_forward.2} parent=5 // pred_region
      %s1458 = ssub.s32 %s15, 2
      // Predicated region
      $region61: #{model_forward.2} parent=59 // pred_check
        %p1459 = pneg %p196
      $region62: #{model_forward.2} parent=59 // pred_check_branch
        %1461 = sbr.rel (%p1459) target = $region64
      $region63: #{model_forward.2} parent=59 // pred_region
        %p1462 = scmp.lt.s32.totalorder %s21, 1
        %s1463 = scalar_select %p1462, %s21, 1
        %s1464 = smul.addr %s1463, 2
        %s1465 = smul.addr %s1464, 4
        %s1466 = scalar_lea.vmem %s7, %s1465
      $region64: #{model_forward.2} parent=59 // pred_fallthru
        _
      // Predicated region
      $region65: #{model_forward.2} parent=59 // pred_check
        %p1467 = pneg %p222
      $region66: #{model_forward.2} parent=59 // pred_check_branch
        %1469 = sbr.rel (%p1467) target = $region68
      $region67: #{model_forward.2} parent=59 // pred_region
        %p1470 = scmp.lt.s32.totalorder %s21, 1
        %s1471 = scalar_select %p1470, %s21, 1
        %s1472 = smul.addr %s1471, 2
        %s1473 = smul.addr %s1472, 4
        %s1474 = scalar_lea.vmem %s8, %s1473
      $region68: #{model_forward.2} parent=59 // pred_fallthru
        _
    $region60: #{model_forward.2} parent=5 // pred_fallthru
      _
  $region6: #{model_forward.2} parent=0 // loop_footer
    %s19 = sadd.s32 1, %s15
  $region7: #{model_forward.2} parent=0 // loop_footer_branch
    %14 = sbr.rel target = $region3
  $region8: #{model_forward.2} parent=0 // loop_exit
    _

// kernel: model_forward.3
$region0: #{model_forward.3}
  #allocation0 [shape = 'u32[]', space=smem, size = 0x4, offset = 0x4, fixed_abs, tag = 'smem constant byte address 0x4 - core index']
  #allocation1 [shape = 'u32[144,128]{1,0:T(1,128)}', space=vmem, size = 0x12000, scoped, tag = 'internal scratch']
  %s0 = inlined_call_operand.vmem [shape: bf16[8,2,128], index: 0, kind: input, shape index: {}]
  %s1 = inlined_call_operand.vmem [shape: bf16[2,16,128], index: 1, kind: input, shape index: {}]
  %s2 = inlined_call_operand.vmem [shape: bf16[2,16,128], index: 2, kind: input, shape index: {}]
  %s3 = inlined_call_operand.vmem [shape: s32[8,2,1], index: 3, kind: input, shape index: {}]
  %s4 = inlined_call_operand.vmem [shape: s32[2,1], index: 4, kind: input, shape index: {}]
  %s5 = inlined_call_operand.vmem [shape: bf16[128,128], index: 5, kind: input, shape index: {}]
  %s6 = inlined_call_operand.vmem [shape: f32[1,128], index: 6, kind: input, shape index: {}]
  %s7 = inlined_call_operand.vmem [shape: bf16[128,384], index: 7, kind: input, shape index: {}]
  %s8 = inlined_call_operand.vmem [shape: bf16[128,384], index: 8, kind: input, shape index: {}]
  %s9 = inlined_call_operand.vmem [shape: f32[1,384], index: 9, kind: input, shape index: {}]
  %s10 = inlined_call_operand.vmem [shape: bf16[128,384], index: 10, kind: input, shape index: {}]
  %s11 = inlined_call_operand.vmem [shape: f32[1,384], index: 11, kind: input, shape index: {}]
  %s12 = inlined_call_operand.vmem [shape: bf16[128,128], index: 12, kind: input, shape index: {}]
  %s13 = inlined_call_operand.vmem [shape: f32[1,128], index: 13, kind: input, shape index: {}]
  %s14 = inlined_call_operand.vmem [shape: f32[8,128], index: 14, kind: output, shape index: {}]
  %s15 = sld [smem:[#allocation0]]
  $region73: #{model_forward.3} parent=0
    _
  %s17 = ssub.s32 1, %s15
  %s18 = scalar_select 0, %s17, %s15
  // Predicated region
  $region2: #{model_forward.3} parent=0 // pred_check
    _
  $region3: #{model_forward.3} parent=0 // pred_check_branch
    %20 = sbr.rel (0) target = $region5
  $region4: #{model_forward.3} parent=0 // pred_region
    _
  $region5: #{model_forward.3} parent=0 // pred_fallthru
    _
  // Predicated region
  $region6: #{model_forward.3} parent=0 // pred_check
    _
  $region7: #{model_forward.3} parent=0 // pred_check_branch
    %22 = sbr.rel (0) target = $region9
  $region8: #{model_forward.3} parent=0 // pred_region
    _
  $region9: #{model_forward.3} parent=0 // pred_fallthru
    _
  // Predicated region
  $region10: #{model_forward.3} parent=0 // pred_check
    _
  $region11: #{model_forward.3} parent=0 // pred_check_branch
    %24 = sbr.rel (0) target = $region13
  $region12: #{model_forward.3} parent=0 // pred_region
    _
  $region13: #{model_forward.3} parent=0 // pred_fallthru
    _
  // Predicated region
  $region14: #{model_forward.3} parent=0 // pred_check
    _
  $region15: #{model_forward.3} parent=0 // pred_check_branch
    %26 = sbr.rel (0) target = $region17
  $region16: #{model_forward.3} parent=0 // pred_region
    _
  $region17: #{model_forward.3} parent=0 // pred_fallthru
    _
  // Predicated region
  $region18: #{model_forward.3} parent=0 // pred_check
    _
  $region19: #{model_forward.3} parent=0 // pred_check_branch
    %28 = sbr.rel (0) target = $region21
  $region20: #{model_forward.3} parent=0 // pred_region
    _
  $region21: #{model_forward.3} parent=0 // pred_fallthru
    _
  // Predicated region
  $region22: #{model_forward.3} parent=0 // pred_check
    _
  $region23: #{model_forward.3} parent=0 // pred_check_branch
    %30 = sbr.rel (0) target = $region25
  $region24: #{model_forward.3} parent=0 // pred_region
    _
  $region25: #{model_forward.3} parent=0 // pred_fallthru
    _
  // Predicated region
  $region26: #{model_forward.3} parent=0 // pred_check
    _
  $region27: #{model_forward.3} parent=0 // pred_check_branch
    %32 = sbr.rel (0) target = $region29
  $region28: #{model_forward.3} parent=0 // pred_region
    _
  $region29: #{model_forward.3} parent=0 // pred_fallthru
    _
  // Predicated region
  $region30: #{model_forward.3} parent=0 // pred_check
    _
  $region31: #{model_forward.3} parent=0 // pred_check_branch
    %34 = sbr.rel (0) target = $region33
  $region32: #{model_forward.3} parent=0 // pred_region
    _
  $region33: #{model_forward.3} parent=0 // pred_fallthru
    _
  // Predicated region
  $region34: #{model_forward.3} parent=0 // pred_check
    _
  $region35: #{model_forward.3} parent=0 // pred_check_branch
    %36 = sbr.rel (0) target = $region37
  $region36: #{model_forward.3} parent=0 // pred_region
    _
  $region37: #{model_forward.3} parent=0 // pred_fallthru
    _
  // Predicated region
  $region38: #{model_forward.3} parent=0 // pred_check
    _
  $region39: #{model_forward.3} parent=0 // pred_check_branch
    %38 = sbr.rel (0) target = $region41
  $region40: #{model_forward.3} parent=0 // pred_region
    _
  $region41: #{model_forward.3} parent=0 // pred_fallthru
    _
  // Predicated region
  $region42: #{model_forward.3} parent=0 // pred_check
    _
  $region43: #{model_forward.3} parent=0 // pred_check_branch
    %40 = sbr.rel (0) target = $region45
  $region44: #{model_forward.3} parent=0 // pred_region
    _
  $region45: #{model_forward.3} parent=0 // pred_fallthru
    _
  // Predicated region
  $region46: #{model_forward.3} parent=0 // pred_check
    _
  $region47: #{model_forward.3} parent=0 // pred_check_branch
    %42 = sbr.rel (0) target = $region49
  $region48: #{model_forward.3} parent=0 // pred_region
    _
  $region49: #{model_forward.3} parent=0 // pred_fallthru
    _
  // Predicated region
  $region50: #{model_forward.3} parent=0 // pred_check
    _
  $region51: #{model_forward.3} parent=0 // pred_check_branch
    %44 = sbr.rel (0) target = $region53
  $region52: #{model_forward.3} parent=0 // pred_region
    _
  $region53: #{model_forward.3} parent=0 // pred_fallthru
    _
  // Predicated region
  $region54: #{model_forward.3} parent=0 // pred_check
    _
  $region55: #{model_forward.3} parent=0 // pred_check_branch
    %46 = sbr.rel (0) target = $region57
  $region56: #{model_forward.3} parent=0 // pred_region
    _
  $region57: #{model_forward.3} parent=0 // pred_fallthru
    _
  %v48 = vld [vmem:[%s1] sm:$0xf]
  %v49 = vld [vmem:[%s1 + $0x4] sm:$0xf]
  %v50 = vld [vmem:[%s1 + $0x8] sm:$0xf]
  %v51 = vld [vmem:[%s1 + $0xc] sm:$0xf]
  %v52 = vunpack.c.l.bf16 %v48
  %v53 = vunpack.c.l.bf16 %v49
  %v54 = vunpack.c.l.bf16 %v50
  %v55 = vunpack.c.l.bf16 %v51
  %v56 = vld [vmem:[%s2] sm:$0xf]
  %v57 = vld [vmem:[%s2 + $0x4] sm:$0xf]
  %v58 = vld [vmem:[%s2 + $0x8] sm:$0xf]
  %v59 = vld [vmem:[%s2 + $0xc] sm:$0xf]
  %v60 = vunpack.c.l.bf16 %v56
  %v61 = vunpack.c.l.bf16 %v57
  %v62 = vunpack.c.l.bf16 %v58
  %v63 = vunpack.c.l.bf16 %v59
  %v64 = vld [vmem:[%s4] sm:$0x3]
  %v65 = vlaneseq
  %v66 = vand.u32 %v65, 127
  loop: start=0, step=1, limit=8
  $region58: #{model_forward.3} parent=0 // loop_pre_header
    _
  $region59: #{model_forward.3} parent=0 // loop_header
    %s68 = sphi 0, %s72
    %p69 = scmp.ge.s32.totalorder %s68, 8
    %v73 = vphi 0.0, %v1099
    %v74 = vphi 0.0, %v1243
  $region60: #{model_forward.3} parent=0 // loop_header_branch
    %71 = sbr.rel (%p69) target = $region64
  $region61: #{model_forward.3} parent=0 // loop_body
    %v75 = vpack.c.bf16 %v73, %v73
    %s76 = scalar_lea.vmem %s0, %s68
    %v77 = vld [vmem:[%s76] sm:$0x1]
    %s78 = smul.u32 %s68, 2
    %s79 = scalar_lea.vmem %s3, %s78
    %v80 = vld [vmem:[%s79] sm:$0x3]
    %v81 = vld [vmem:[%s5] sm:$0xf]
    %v82 = vld [vmem:[%s5 + $0x4] sm:$0xf]
    %v83 = vld [vmem:[%s5 + $0x8] sm:$0xf]
    %v84 = vld [vmem:[%s5 + $0xc] sm:$0xf]
    %v85 = vld [vmem:[%s5 + $0x10] sm:$0xf]
    %v86 = vld [vmem:[%s5 + $0x14] sm:$0xf]
    %v87 = vld [vmem:[%s5 + $0x18] sm:$0xf]
    %v88 = vld [vmem:[%s5 + $0x1c] sm:$0xf]
    %v89 = vld [vmem:[%s5 + $0x20] sm:$0xf]
    %v90 = vld [vmem:[%s5 + $0x24] sm:$0xf]
    %v91 = vld [vmem:[%s5 + $0x28] sm:$0xf]
    %v92 = vld [vmem:[%s5 + $0x2c] sm:$0xf]
    %v93 = vld [vmem:[%s5 + $0x30] sm:$0xf]
    %v94 = vld [vmem:[%s5 + $0x34] sm:$0xf]
    %v95 = vld [vmem:[%s5 + $0x38] sm:$0xf]
    %v96 = vld [vmem:[%s5 + $0x3c] sm:$0xf]
    %v113 = vunpack.c.l.b16 %v81
    %v114 = vunpack.c.l.b16 %v82
    %v115 = vunpack.c.l.b16 %v83
    %v116 = vunpack.c.l.b16 %v84
    %v117 = vunpack.c.l.b16 %v85
    %v118 = vunpack.c.l.b16 %v86
    %v119 = vunpack.c.l.b16 %v87
    %v120 = vunpack.c.l.b16 %v88
    %v121 = vunpack.c.l.b16 %v89
    %v122 = vunpack.c.l.b16 %v90
    %v123 = vunpack.c.l.b16 %v91
    %v124 = vunpack.c.l.b16 %v92
    %v125 = vunpack.c.l.b16 %v93
    %v126 = vunpack.c.l.b16 %v94
    %v127 = vunpack.c.l.b16 %v95
    %v128 = vunpack.c.l.b16 %v96
    %v129 = vpack.c.b16 %v114, %v113
    %v130 = vpack.c.b16 %v116, %v115
    %v131 = vpack.c.b16 %v118, %v117
    %v132 = vpack.c.b16 %v120, %v119
    %v133 = vpack.c.b16 %v122, %v121
    %v134 = vpack.c.b16 %v124, %v123
    %v135 = vpack.c.b16 %v126, %v125
    %v136 = vpack.c.b16 %v128, %v127
    %145 = vmatprep.subr.bf16.mxu0 0
    %146 = vmatpush1.bf16.msra.mxu0 %v129
    %147 = vmatprep.subr.bf16.mxu0 0
    %148 = vmatpush1.bf16.msra.mxu0 %v130
    %149 = vmatprep.subr.bf16.mxu0 0
    %150 = vmatpush1.bf16.msra.mxu0 %v131
    %151 = vmatprep.subr.bf16.mxu0 0
    %152 = vmatpush1.bf16.msra.mxu0 %v132
    %153 = vmatprep.subr.bf16.mxu0 0
    %154 = vmatpush1.bf16.msra.mxu0 %v133
    %155 = vmatprep.subr.bf16.mxu0 0
    %156 = vmatpush1.bf16.msra.mxu0 %v134
    %157 = vmatprep.subr.bf16.mxu0 0
    %158 = vmatpush1.bf16.msra.mxu0 %v135
    %159 = vmatprep.subr.bf16.mxu0 0
    %160 = vmatpush1.bf16.msra.mxu0 %v136
    %161 = vmatprep.subr.bf16.mxu0 0
    %162 = vmatpush1.bf16.msra.mxu0 0
    %163 = vmatprep.subr.bf16.mxu0 0
    %164 = vmatpush1.bf16.msra.mxu0 0
    %165 = vmatprep.subr.bf16.mxu0 0
    %166 = vmatpush1.bf16.msra.mxu0 0
    %167 = vmatprep.subr.bf16.mxu0 0
    %168 = vmatpush1.bf16.msra.mxu0 0
    %169 = vmatprep.subr.bf16.mxu0 0
    %170 = vmatpush1.bf16.msra.mxu0 0
    %171 = vmatprep.subr.bf16.mxu0 0
    %172 = vmatpush1.bf16.msra.mxu0 0
    %173 = vmatprep.subr.bf16.mxu0 0
    %174 = vmatpush1.bf16.msra.mxu0 0
    %175 = vmatprep.subr.bf16.mxu0 0
    %176 = vmatpush1.bf16.msra.mxu0 0
    %177 = vmatprep.mubr.bf16.mxu0 0
    %178 = vmatmul.mubr.bf16.gmra.mrb[0].mxu0 %v75
    %v179 = vpop.f32.mrb[0].mxu0
    %v180 = vadd.f32 0.0, %v179
    %v181 = vpop.f32.mrb[0].mxu0
    %v182 = vpop.f32.mrb[0].mxu0
    %v183 = vpop.f32.mrb[0].mxu0
    %184 = vdwg.mxu0
    %v187 = vunpack.c.l.s4 1966171168
    %v188 = vunpack.c.0.s8 %v187
    %v189 = vlaneseq
    %v190 = vshrl.u32 %v189, 7
    %v191 = vsub.s32 %v188, %v190
    %v192 = vrot.slane %v180, %v191
    %v193 = vcombine.high %v192, %v192
    %v195 = vunpack.c.l.s4 1966171168
    %v196 = vunpack.c.0.s8 %v195
    %v197 = vlaneseq
    %v198 = vshrl.u32 %v197, 7
    %v199 = vsub.s32 %v196, %v198
    %v200 = vrot.slane %v192, %v199
    %v202 = vunpack.c.l.s4 1966171168
    %v203 = vunpack.c.0.s8 %v202
    %v204 = vlaneseq
    %v205 = vshrl.u32 %v204, 7
    %v206 = vsub.s32 %v203, %v205
    %v207 = vrot.slane %v193, %v206
    %v208 = vlaneseq
    %v209 = vshrl.u32 %v208, 7
    %v210 = vsub.s32 0, %v209
    %v211 = vrot.slane %v200, %v210
    %v212 = vlaneseq
    %v213 = vshrl.u32 %v212, 7
    %v214 = vsub.s32 0, %v213
    %v215 = vrot.slane %v207, %v214
    %v218 = vadd.f32 %v60, %v211
    %v219 = vadd.f32 %v61, %v211
    %v220 = vadd.f32 %v62, %v215
    %v221 = vadd.f32 %v63, %v215
    %v222 = vtanh.pop %v218
    %v223 = vtanh.pop %v219
    %v224 = vtanh.pop %v220
    %v225 = vtanh.pop %v221
    %v226 = vld [vmem:[%s6] sm:$0x1]
    %v228 = vlaneseq
    %v229 = vshrl.u32 %v228, 7
    %v230 = vsub.s32 0, %v229
    %v231 = vrot.slane %v226, %v230
    %v233 = vmul.f32 %v222, %v231
    %v234 = vmul.f32 %v223, %v231
    %v235 = vmul.f32 %v224, %v231
    %v236 = vmul.f32 %v225, %v231
    %237 = vadd.xlane.f32.xlu0 %v233
    %v238 = vpop.xlane.xlu0 %237
    %239 = vadd.xlane.f32.xlu0 %v234
    %v240 = vpop.xlane.xlu0 %239
    %241 = vadd.xlane.f32.xlu0 %v235
    %v242 = vpop.xlane.xlu0 %241
    %243 = vadd.xlane.f32.xlu0 %v236
    %v244 = vpop.xlane.xlu0 %243
    %v245 = vmax.f32 %v238, %v240
    %v246 = vrot.slane %v245, 4
    %v247 = vmax.f32 %v245, %v246
    %v248 = vrot.slane %v247, 2
    %v249 = vmax.f32 %v247, %v248
    %v250 = vrot.slane %v249, 1
    %v251 = vmax.f32 %v249, %v250
    %v252 = vmax.f32 %v242, %v244
    %v253 = vrot.slane %v252, 4
    %v254 = vmax.f32 %v252, %v253
    %v255 = vrot.slane %v254, 2
    %v256 = vmax.f32 %v254, %v255
    %v257 = vrot.slane %v256, 1
    %v258 = vmax.f32 %v256, %v257
    %v259 = vsub.f32 %v238, %v251
    %v260 = vsub.f32 %v240, %v251
    %v261 = vsub.f32 %v242, %v258
    %v262 = vsub.f32 %v244, %v258
    %v263 = vmul.f32 %v259, 1.442695
    %v264 = vpow.pop %v263
    %v265 = vmul.f32 %v260, 1.442695
    %v266 = vpow.pop %v265
    %v267 = vmul.f32 %v261, 1.442695
    %v268 = vpow.pop %v267
    %v269 = vmul.f32 %v262, 1.442695
    %v270 = vpow.pop %v269
    %v271 = vadd.f32 %v264, %v266
    %v272 = vrot.slane %v271, 4
    %v273 = vadd.f32 %v271, %v272
    %v274 = vrot.slane %v273, 2
    %v275 = vadd.f32 %v273, %v274
    %v276 = vrot.slane %v275, 1
    %v277 = vadd.f32 %v275, %v276
    %v278 = vadd.f32 %v268, %v270
    %v279 = vrot.slane %v278, 4
    %v280 = vadd.f32 %v278, %v279
    %v281 = vrot.slane %v280, 2
    %v282 = vadd.f32 %v280, %v281
    %v283 = vrot.slane %v282, 1
    %v284 = vadd.f32 %v282, %v283
    %v285 = vrcp.pop %v277
    %v286 = vrcp.pop %v284
    %v287 = vmul.f32 %v264, %v285
    %v288 = vmul.f32 %v266, %v285
    %v289 = vmul.f32 %v268, %v286
    %v290 = vmul.f32 %v270, %v286
    %v291 = vmul.f32 %v287, %v52
    %v292 = vmul.f32 %v288, %v53
    %v293 = vmul.f32 %v289, %v54
    %v294 = vmul.f32 %v290, %v55
    %v295 = vadd.f32 %v291, %v292
    %v296 = vrot.slane %v295, 4
    %v297 = vadd.f32 %v295, %v296
    %v298 = vrot.slane %v297, 2
    %v299 = vadd.f32 %v297, %v298
    %v300 = vrot.slane %v299, 1
    %v301 = vadd.f32 %v299, %v300
    %v302 = vadd.f32 %v293, %v294
    %v303 = vrot.slane %v302, 4
    %v304 = vadd.f32 %v302, %v303
    %v305 = vrot.slane %v304, 2
    %v306 = vadd.f32 %v304, %v305
    %v307 = vrot.slane %v306, 1
    %v308 = vadd.f32 %v306, %v307
    %v309 = vld [vmem:[%s7] sm:$0xff]
    %v310 = vld [vmem:[%s7 + $0x8] sm:$0xf]
    %v311 = vld [vmem:[%s7 + $0xc] sm:$0xff]
    %v312 = vld [vmem:[%s7 + $0x14] sm:$0xf]
    %v313 = vld [vmem:[%s7 + $0x18] sm:$0xff]
    %v314 = vld [vmem:[%s7 + $0x20] sm:$0xf]
    %v315 = vld [vmem:[%s7 + $0x24] sm:$0xff]
    %v316 = vld [vmem:[%s7 + $0x2c] sm:$0xf]
    %v317 = vld [vmem:[%s7 + $0x30] sm:$0xff]
    %v318 = vld [vmem:[%s7 + $0x38] sm:$0xf]
    %v319 = vld [vmem:[%s7 + $0x3c] sm:$0xff]
    %v320 = vld [vmem:[%s7 + $0x44] sm:$0xf]
    %v321 = vld [vmem:[%s7 + $0x48] sm:$0xff]
    %v322 = vld [vmem:[%s7 + $0x50] sm:$0xf]
    %v323 = vld [vmem:[%s7 + $0x54] sm:$0xff]
    %v324 = vld [vmem:[%s7 + $0x5c] sm:$0xf]
    %v325 = vld [vmem:[%s7 + $0x60] sm:$0xff]
    %v326 = vld [vmem:[%s7 + $0x68] sm:$0xf]
    %v327 = vld [vmem:[%s7 + $0x6c] sm:$0xff]
    %v328 = vld [vmem:[%s7 + $0x74] sm:$0xf]
    %v329 = vld [vmem:[%s7 + $0x78] sm:$0xff]
    %v330 = vld [vmem:[%s7 + $0x80] sm:$0xf]
    %v331 = vld [vmem:[%s7 + $0x84] sm:$0xff]
    %v332 = vld [vmem:[%s7 + $0x8c] sm:$0xf]
    %v333 = vld [vmem:[%s7 + $0x90] sm:$0xff]
    %v334 = vld [vmem:[%s7 + $0x98] sm:$0xf]
    %v335 = vld [vmem:[%s7 + $0x9c] sm:$0xff]
    %v336 = vld [vmem:[%s7 + $0xa4] sm:$0xf]
    %v337 = vld [vmem:[%s7 + $0xa8] sm:$0xff]
    %v338 = vld [vmem:[%s7 + $0xb0] sm:$0xf]
    %v339 = vld [vmem:[%s7 + $0xb4] sm:$0xff]
    %v340 = vld [vmem:[%s7 + $0xbc] sm:$0xf]
    %v341 = vpack.c.bf16 %v301, %v301
    %v342 = vpack.c.bf16 %v308, %v308
    %v343 = vld [vmem:[%s8] sm:$0xff]
    %v344 = vld [vmem:[%s8 + $0x8] sm:$0xf]
    %v345 = vld [vmem:[%s8 + $0xc] sm:$0xff]
    %v346 = vld [vmem:[%s8 + $0x14] sm:$0xf]
    %v347 = vld [vmem:[%s8 + $0x18] sm:$0xff]
    %v348 = vld [vmem:[%s8 + $0x20] sm:$0xf]
    %v349 = vld [vmem:[%s8 + $0x24] sm:$0xff]
    %v350 = vld [vmem:[%s8 + $0x2c] sm:$0xf]
    %v351 = vld [vmem:[%s8 + $0x30] sm:$0xff]
    %v352 = vld [vmem:[%s8 + $0x38] sm:$0xf]
    %v353 = vld [vmem:[%s8 + $0x3c] sm:$0xff]
    %v354 = vld [vmem:[%s8 + $0x44] sm:$0xf]
    %v355 = vld [vmem:[%s8 + $0x48] sm:$0xff]
    %v356 = vld [vmem:[%s8 + $0x50] sm:$0xf]
    %v357 = vld [vmem:[%s8 + $0x54] sm:$0xff]
    %v358 = vld [vmem:[%s8 + $0x5c] sm:$0xf]
    %v359 = vld [vmem:[%s8 + $0x60] sm:$0xff]
    %v360 = vld [vmem:[%s8 + $0x68] sm:$0xf]
    %v361 = vld [vmem:[%s8 + $0x6c] sm:$0xff]
    %v362 = vld [vmem:[%s8 + $0x74] sm:$0xf]
    %v363 = vld [vmem:[%s8 + $0x78] sm:$0xff]
    %v364 = vld [vmem:[%s8 + $0x80] sm:$0xf]
    %v365 = vld [vmem:[%s8 + $0x84] sm:$0xff]
    %v366 = vld [vmem:[%s8 + $0x8c] sm:$0xf]
    %v367 = vld [vmem:[%s8 + $0x90] sm:$0xff]
    %v368 = vld [vmem:[%s8 + $0x98] sm:$0xf]
    %v369 = vld [vmem:[%s8 + $0x9c] sm:$0xff]
    %v370 = vld [vmem:[%s8 + $0xa4] sm:$0xf]
    %v371 = vld [vmem:[%s8 + $0xa8] sm:$0xff]
    %v372 = vld [vmem:[%s8 + $0xb0] sm:$0xf]
    %v373 = vld [vmem:[%s8 + $0xb4] sm:$0xff]
    %v374 = vld [vmem:[%s8 + $0xbc] sm:$0xf]
    %v377 = vunpack.c.l.b16 %v341
    %v378 = vunpack.c.l.b16 %v342
    %vm379 = vcmask 1041409
    %v380 = vsel %vm379, %v378, %v377
    %v381 = vpack.c.b16 %v380, %v380
    %v415 = vunpack.c.l.b16 %v343
    %v416 = vunpack.c.h.b16 %v343
    %v417 = vunpack.c.l.b16 %v344
    %v418 = vunpack.c.l.b16 %v345
    %v419 = vunpack.c.h.b16 %v345
    %v420 = vunpack.c.l.b16 %v346
    %v421 = vunpack.c.l.b16 %v347
    %v422 = vunpack.c.h.b16 %v347
    %v423 = vunpack.c.l.b16 %v348
    %v424 = vunpack.c.l.b16 %v349
    %v425 = vunpack.c.h.b16 %v349
    %v426 = vunpack.c.l.b16 %v350
    %v427 = vunpack.c.l.b16 %v351
    %v428 = vunpack.c.h.b16 %v351
    %v429 = vunpack.c.l.b16 %v352
    %v430 = vunpack.c.l.b16 %v353
    %v431 = vunpack.c.h.b16 %v353
    %v432 = vunpack.c.l.b16 %v354
    %v433 = vunpack.c.l.b16 %v355
    %v434 = vunpack.c.h.b16 %v355
    %v435 = vunpack.c.l.b16 %v356
    %v436 = vunpack.c.l.b16 %v357
    %v437 = vunpack.c.h.b16 %v357
    %v438 = vunpack.c.l.b16 %v358
    %v439 = vunpack.c.l.b16 %v359
    %v440 = vunpack.c.h.b16 %v359
    %v441 = vunpack.c.l.b16 %v360
    %v442 = vunpack.c.l.b16 %v361
    %v443 = vunpack.c.h.b16 %v361
    %v444 = vunpack.c.l.b16 %v362
    %v445 = vunpack.c.l.b16 %v363
    %v446 = vunpack.c.h.b16 %v363
    %v447 = vunpack.c.l.b16 %v364
    %v448 = vunpack.c.l.b16 %v365
    %v449 = vunpack.c.h.b16 %v365
    %v450 = vunpack.c.l.b16 %v366
    %v451 = vunpack.c.l.b16 %v367
    %v452 = vunpack.c.h.b16 %v367
    %v453 = vunpack.c.l.b16 %v368
    %v454 = vunpack.c.l.b16 %v369
    %v455 = vunpack.c.h.b16 %v369
    %v456 = vunpack.c.l.b16 %v370
    %v457 = vunpack.c.l.b16 %v371
    %v458 = vunpack.c.h.b16 %v371
    %v459 = vunpack.c.l.b16 %v372
    %v460 = vunpack.c.l.b16 %v373
    %v461 = vunpack.c.h.b16 %v373
    %v462 = vunpack.c.l.b16 %v374
    %v463 = vpack.c.b16 %v418, %v415
    %v464 = vpack.c.b16 %v419, %v416
    %v465 = vpack.c.b16 %v420, %v417
    %v466 = vpack.c.b16 %v424, %v421
    %v467 = vpack.c.b16 %v425, %v422
    %v468 = vpack.c.b16 %v426, %v423
    %v469 = vpack.c.b16 %v430, %v427
    %v470 = vpack.c.b16 %v431, %v428
    %v471 = vpack.c.b16 %v432, %v429
    %v472 = vpack.c.b16 %v436, %v433
    %v473 = vpack.c.b16 %v437, %v434
    %v474 = vpack.c.b16 %v438, %v435
    %v475 = vpack.c.b16 %v442, %v439
    %v476 = vpack.c.b16 %v443, %v440
    %v477 = vpack.c.b16 %v444, %v441
    %v478 = vpack.c.b16 %v448, %v445
    %v479 = vpack.c.b16 %v449, %v446
    %v480 = vpack.c.b16 %v450, %v447
    %v481 = vpack.c.b16 %v454, %v451
    %v482 = vpack.c.b16 %v455, %v452
    %v483 = vpack.c.b16 %v456, %v453
    %v484 = vpack.c.b16 %v460, %v457
    %v485 = vpack.c.b16 %v461, %v458
    %v486 = vpack.c.b16 %v462, %v459
    %511 = vmatprep.subr.bf16.mxu0 %v464
    %512 = vmatpush1.bf16.msra.mxu0 %v463
    %513 = vmatprep.subr.bf16.mxu0 %v467
    %514 = vmatpush1.bf16.msra.mxu0 %v466
    %515 = vmatprep.subr.bf16.mxu0 %v470
    %516 = vmatpush1.bf16.msra.mxu0 %v469
    %517 = vmatprep.subr.bf16.mxu0 %v473
    %518 = vmatpush1.bf16.msra.mxu0 %v472
    %519 = vmatprep.subr.bf16.mxu0 %v476
    %520 = vmatpush1.bf16.msra.mxu0 %v475
    %521 = vmatprep.subr.bf16.mxu0 %v479
    %522 = vmatpush1.bf16.msra.mxu0 %v478
    %523 = vmatprep.subr.bf16.mxu0 %v482
    %524 = vmatpush1.bf16.msra.mxu0 %v481
    %525 = vmatprep.subr.bf16.mxu0 %v485
    %526 = vmatpush1.bf16.msra.mxu0 %v484
    %527 = vmatprep.subr.bf16.mxu0 0
    %528 = vmatpush1.bf16.msra.mxu0 0
    %529 = vmatprep.subr.bf16.mxu0 0
    %530 = vmatpush1.bf16.msra.mxu0 0
    %531 = vmatprep.subr.bf16.mxu0 0
    %532 = vmatpush1.bf16.msra.mxu0 0
    %533 = vmatprep.subr.bf16.mxu0 0
    %534 = vmatpush1.bf16.msra.mxu0 0
    %535 = vmatprep.subr.bf16.mxu0 0
    %536 = vmatpush1.bf16.msra.mxu0 0
    %537 = vmatprep.subr.bf16.mxu0 0
    %538 = vmatpush1.bf16.msra.mxu0 0
    %539 = vmatprep.subr.bf16.mxu0 0
    %540 = vmatpush1.bf16.msra.mxu0 0
    %541 = vmatprep.subr.bf16.mxu0 0
    %542 = vmatpush1.bf16.msra.mxu0 0
    %543 = vmatprep.mubr.bf16.mxu0 0
    %544 = vmatmul.mubr.bf16.gmra.mrb[0].mxu0 %v381
    %v545 = vpop.f32.mrb[0].mxu0
    %v546 = vadd.f32 0.0, %v545
    %v547 = vpop.f32.mrb[0].mxu0
    %v548 = vadd.f32 0.0, %v547
    %v549 = vpop.f32.mrb[0].mxu0
    %v550 = vpop.f32.mrb[0].mxu0
    %551 = vdwg.mxu0
    %552 = vmatprep.subr.bf16.mxu0 0
    %553 = vmatpush1.bf16.msra.mxu0 %v465
    %554 = vmatprep.subr.bf16.mxu0 0
    %555 = vmatpush1.bf16.msra.mxu0 %v468
    %556 = vmatprep.subr.bf16.mxu0 0
    %557 = vmatpush1.bf16.msra.mxu0 %v471
    %558 = vmatprep.subr.bf16.mxu0 0
    %559 = vmatpush1.bf16.msra.mxu0 %v474
    %560 = vmatprep.subr.bf16.mxu0 0
    %561 = vmatpush1.bf16.msra.mxu0 %v477
    %562 = vmatprep.subr.bf16.mxu0 0
    %563 = vmatpush1.bf16.msra.mxu0 %v480
    %564 = vmatprep.subr.bf16.mxu0 0
    %565 = vmatpush1.bf16.msra.mxu0 %v483
    %566 = vmatprep.subr.bf16.mxu0 0
    %567 = vmatpush1.bf16.msra.mxu0 %v486
    %568 = vmatprep.subr.bf16.mxu0 0
    %569 = vmatpush1.bf16.msra.mxu0 0
    %570 = vmatprep.subr.bf16.mxu0 0
    %571 = vmatpush1.bf16.msra.mxu0 0
    %572 = vmatprep.subr.bf16.mxu0 0
    %573 = vmatpush1.bf16.msra.mxu0 0
    %574 = vmatprep.subr.bf16.mxu0 0
    %575 = vmatpush1.bf16.msra.mxu0 0
    %576 = vmatprep.subr.bf16.mxu0 0
    %577 = vmatpush1.bf16.msra.mxu0 0
    %578 = vmatprep.subr.bf16.mxu0 0
    %579 = vmatpush1.bf16.msra.mxu0 0
    %580 = vmatprep.subr.bf16.mxu0 0
    %581 = vmatpush1.bf16.msra.mxu0 0
    %582 = vmatprep.subr.bf16.mxu0 0
    %583 = vmatpush1.bf16.msra.mxu0 0
    %584 = vmatprep.mubr.bf16.mxu0 0
    %585 = vmatmul.mubr.bf16.gmra.mrb[0].mxu0 %v381
    %v586 = vpop.f32.mrb[0].mxu0
    %v587 = vadd.f32 0.0, %v586
    %v588 = vpop.f32.mrb[0].mxu0
    %v589 = vpop.f32.mrb[0].mxu0
    %v590 = vpop.f32.mrb[0].mxu0
    %591 = vdwg.mxu0
    %v624 = vunpack.c.l.b16 %v309
    %v625 = vunpack.c.h.b16 %v309
    %v626 = vunpack.c.l.b16 %v310
    %v627 = vunpack.c.l.b16 %v311
    %v628 = vunpack.c.h.b16 %v311
    %v629 = vunpack.c.l.b16 %v312
    %v630 = vunpack.c.l.b16 %v313
    %v631 = vunpack.c.h.b16 %v313
    %v632 = vunpack.c.l.b16 %v314
    %v633 = vunpack.c.l.b16 %v315
    %v634 = vunpack.c.h.b16 %v315
    %v635 = vunpack.c.l.b16 %v316
    %v636 = vunpack.c.l.b16 %v317
    %v637 = vunpack.c.h.b16 %v317
    %v638 = vunpack.c.l.b16 %v318
    %v639 = vunpack.c.l.b16 %v319
    %v640 = vunpack.c.h.b16 %v319
    %v641 = vunpack.c.l.b16 %v320
    %v642 = vunpack.c.l.b16 %v321
    %v643 = vunpack.c.h.b16 %v321
    %v644 = vunpack.c.l.b16 %v322
    %v645 = vunpack.c.l.b16 %v323
    %v646 = vunpack.c.h.b16 %v323
    %v647 = vunpack.c.l.b16 %v324
    %v648 = vunpack.c.l.b16 %v325
    %v649 = vunpack.c.h.b16 %v325
    %v650 = vunpack.c.l.b16 %v326
    %v651 = vunpack.c.l.b16 %v327
    %v652 = vunpack.c.h.b16 %v327
    %v653 = vunpack.c.l.b16 %v328
    %v654 = vunpack.c.l.b16 %v329
    %v655 = vunpack.c.h.b16 %v329
    %v656 = vunpack.c.l.b16 %v330
    %v657 = vunpack.c.l.b16 %v331
    %v658 = vunpack.c.h.b16 %v331
    %v659 = vunpack.c.l.b16 %v332
    %v660 = vunpack.c.l.b16 %v333
    %v661 = vunpack.c.h.b16 %v333
    %v662 = vunpack.c.l.b16 %v334
    %v663 = vunpack.c.l.b16 %v335
    %v664 = vunpack.c.h.b16 %v335
    %v665 = vunpack.c.l.b16 %v336
    %v666 = vunpack.c.l.b16 %v337
    %v667 = vunpack.c.h.b16 %v337
    %v668 = vunpack.c.l.b16 %v338
    %v669 = vunpack.c.l.b16 %v339
    %v670 = vunpack.c.h.b16 %v339
    %v671 = vunpack.c.l.b16 %v340
    %v672 = vpack.c.b16 %v627, %v624
    %v673 = vpack.c.b16 %v628, %v625
    %v674 = vpack.c.b16 %v629, %v626
    %v675 = vpack.c.b16 %v633, %v630
    %v676 = vpack.c.b16 %v634, %v631
    %v677 = vpack.c.b16 %v635, %v632
    %v678 = vpack.c.b16 %v639, %v636
    %v679 = vpack.c.b16 %v640, %v637
    %v680 = vpack.c.b16 %v641, %v638
    %v681 = vpack.c.b16 %v645, %v642
    %v682 = vpack.c.b16 %v646, %v643
    %v683 = vpack.c.b16 %v647, %v644
    %v684 = vpack.c.b16 %v651, %v648
    %v685 = vpack.c.b16 %v652, %v649
    %v686 = vpack.c.b16 %v653, %v650
    %v687 = vpack.c.b16 %v657, %v654
    %v688 = vpack.c.b16 %v658, %v655
    %v689 = vpack.c.b16 %v659, %v656
    %v690 = vpack.c.b16 %v663, %v660
    %v691 = vpack.c.b16 %v664, %v661
    %v692 = vpack.c.b16 %v665, %v662
    %v693 = vpack.c.b16 %v669, %v666
    %v694 = vpack.c.b16 %v670, %v667
    %v695 = vpack.c.b16 %v671, %v668
    %720 = vmatprep.subr.bf16.mxu0 %v673
    %721 = vmatpush1.bf16.msra.mxu0 %v672
    %722 = vmatprep.subr.bf16.mxu0 %v676
    %723 = vmatpush1.bf16.msra.mxu0 %v675
    %724 = vmatprep.subr.bf16.mxu0 %v679
    %725 = vmatpush1.bf16.msra.mxu0 %v678
    %726 = vmatprep.subr.bf16.mxu0 %v682
    %727 = vmatpush1.bf16.msra.mxu0 %v681
    %728 = vmatprep.subr.bf16.mxu0 %v685
    %729 = vmatpush1.bf16.msra.mxu0 %v684
    %730 = vmatprep.subr.bf16.mxu0 %v688
    %731 = vmatpush1.bf16.msra.mxu0 %v687
    %732 = vmatprep.subr.bf16.mxu0 %v691
    %733 = vmatpush1.bf16.msra.mxu0 %v690
    %734 = vmatprep.subr.bf16.mxu0 %v694
    %735 = vmatpush1.bf16.msra.mxu0 %v693
    %736 = vmatprep.subr.bf16.mxu0 0
    %737 = vmatpush1.bf16.msra.mxu0 0
    %738 = vmatprep.subr.bf16.mxu0 0
    %739 = vmatpush1.bf16.msra.mxu0 0
    %740 = vmatprep.subr.bf16.mxu0 0
    %741 = vmatpush1.bf16.msra.mxu0 0
    %742 = vmatprep.subr.bf16.mxu0 0
    %743 = vmatpush1.bf16.msra.mxu0 0
    %744 = vmatprep.subr.bf16.mxu0 0
    %745 = vmatpush1.bf16.msra.mxu0 0
    %746 = vmatprep.subr.bf16.mxu0 0
    %747 = vmatpush1.bf16.msra.mxu0 0
    %748 = vmatprep.subr.bf16.mxu0 0
    %749 = vmatpush1.bf16.msra.mxu0 0
    %750 = vmatprep.subr.bf16.mxu0 0
    %751 = vmatpush1.bf16.msra.mxu0 0
    %752 = vmatprep.mubr.bf16.mxu0 0
    %753 = vmatmul.mubr.bf16.gmra.mrb[0].mxu0 %v77
    %v754 = vpop.f32.mrb[0].mxu0
    %v755 = vadd.f32 %v546, %v754
    %v756 = vpop.f32.mrb[0].mxu0
    %v757 = vadd.f32 %v548, %v756
    %v758 = vpop.f32.mrb[0].mxu0
    %v759 = vpop.f32.mrb[0].mxu0
    %760 = vdwg.mxu0
    %761 = vmatprep.subr.bf16.mxu0 0
    %762 = vmatpush1.bf16.msra.mxu0 %v674
    %763 = vmatprep.subr.bf16.mxu0 0
    %764 = vmatpush1.bf16.msra.mxu0 %v677
    %765 = vmatprep.subr.bf16.mxu0 0
    %766 = vmatpush1.bf16.msra.mxu0 %v680
    %767 = vmatprep.subr.bf16.mxu0 0
    %768 = vmatpush1.bf16.msra.mxu0 %v683
    %769 = vmatprep.subr.bf16.mxu0 0
    %770 = vmatpush1.bf16.msra.mxu0 %v686
    %771 = vmatprep.subr.bf16.mxu0 0
    %772 = vmatpush1.bf16.msra.mxu0 %v689
    %773 = vmatprep.subr.bf16.mxu0 0
    %774 = vmatpush1.bf16.msra.mxu0 %v692
    %775 = vmatprep.subr.bf16.mxu0 0
    %776 = vmatpush1.bf16.msra.mxu0 %v695
    %777 = vmatprep.subr.bf16.mxu0 0
    %778 = vmatpush1.bf16.msra.mxu0 0
    %779 = vmatprep.subr.bf16.mxu0 0
    %780 = vmatpush1.bf16.msra.mxu0 0
    %781 = vmatprep.subr.bf16.mxu0 0
    %782 = vmatpush1.bf16.msra.mxu0 0
    %783 = vmatprep.subr.bf16.mxu0 0
    %784 = vmatpush1.bf16.msra.mxu0 0
    %785 = vmatprep.subr.bf16.mxu0 0
    %786 = vmatpush1.bf16.msra.mxu0 0
    %787 = vmatprep.subr.bf16.mxu0 0
    %788 = vmatpush1.bf16.msra.mxu0 0
    %789 = vmatprep.subr.bf16.mxu0 0
    %790 = vmatpush1.bf16.msra.mxu0 0
    %791 = vmatprep.subr.bf16.mxu0 0
    %792 = vmatpush1.bf16.msra.mxu0 0
    %793 = vmatprep.mubr.bf16.mxu0 0
    %794 = vmatmul.mubr.bf16.gmra.mrb[0].mxu0 %v77
    %v795 = vpop.f32.mrb[0].mxu0
    %v796 = vadd.f32 %v587, %v795
    %v797 = vpop.f32.mrb[0].mxu0
    %v798 = vpop.f32.mrb[0].mxu0
    %v799 = vpop.f32.mrb[0].mxu0
    %800 = vdwg.mxu0
    %v801 = vld [vmem:[%s9] sm:$0x7]
    %v803 = vlaneseq
    %v804 = vshrl.u32 %v803, 7
    %v805 = vsub.s32 0, %v804
    %v806 = vrot.slane %v801, %v805
    %v807 = vlaneseq
    %v808 = vshrl.u32 %v807, 7
    %v809 = vsub.s32 1, %v808
    %v810 = vrot.slane %v801, %v809
    %v811 = vlaneseq
    %v812 = vshrl.u32 %v811, 7
    %v813 = vsub.s32 2, %v812
    %v814 = vrot.slane %v801, %v813
    %v818 = vadd.f32 %v755, %v806
    %v819 = vadd.f32 %v757, %v810
    %v820 = vadd.f32 %v796, %v814
    %v821 = vld [vmem:[%s10] sm:$0xff]
    %v822 = vld [vmem:[%s10 + $0x8] sm:$0xf]
    %v823 = vld [vmem:[%s10 + $0xc] sm:$0xff]
    %v824 = vld [vmem:[%s10 + $0x14] sm:$0xf]
    %v825 = vld [vmem:[%s10 + $0x18] sm:$0xff]
    %v826 = vld [vmem:[%s10 + $0x20] sm:$0xf]
    %v827 = vld [vmem:[%s10 + $0x24] sm:$0xff]
    %v828 = vld [vmem:[%s10 + $0x2c] sm:$0xf]
    %v829 = vld [vmem:[%s10 + $0x30] sm:$0xff]
    %v830 = vld [vmem:[%s10 + $0x38] sm:$0xf]
    %v831 = vld [vmem:[%s10 + $0x3c] sm:$0xff]
    %v832 = vld [vmem:[%s10 + $0x44] sm:$0xf]
    %v833 = vld [vmem:[%s10 + $0x48] sm:$0xff]
    %v834 = vld [vmem:[%s10 + $0x50] sm:$0xf]
    %v835 = vld [vmem:[%s10 + $0x54] sm:$0xff]
    %v836 = vld [vmem:[%s10 + $0x5c] sm:$0xf]
    %v837 = vld [vmem:[%s10 + $0x60] sm:$0xff]
    %v838 = vld [vmem:[%s10 + $0x68] sm:$0xf]
    %v839 = vld [vmem:[%s10 + $0x6c] sm:$0xff]
    %v840 = vld [vmem:[%s10 + $0x74] sm:$0xf]
    %v841 = vld [vmem:[%s10 + $0x78] sm:$0xff]
    %v842 = vld [vmem:[%s10 + $0x80] sm:$0xf]
    %v843 = vld [vmem:[%s10 + $0x84] sm:$0xff]
    %v844 = vld [vmem:[%s10 + $0x8c] sm:$0xf]
    %v845 = vld [vmem:[%s10 + $0x90] sm:$0xff]
    %v846 = vld [vmem:[%s10 + $0x98] sm:$0xf]
    %v847 = vld [vmem:[%s10 + $0x9c] sm:$0xff]
    %v848 = vld [vmem:[%s10 + $0xa4] sm:$0xf]
    %v849 = vld [vmem:[%s10 + $0xa8] sm:$0xff]
    %v850 = vld [vmem:[%s10 + $0xb0] sm:$0xf]
    %v851 = vld [vmem:[%s10 + $0xb4] sm:$0xff]
    %v852 = vld [vmem:[%s10 + $0xbc] sm:$0xf]
    %v853 = vld [vmem:[%s11] sm:$0x7]
    %v855 = vlaneseq
    %v856 = vshrl.u32 %v855, 7
    %v857 = vsub.s32 0, %v856
    %v858 = vrot.slane %v853, %v857
    %v859 = vlaneseq
    %v860 = vshrl.u32 %v859, 7
    %v861 = vsub.s32 1, %v860
    %v862 = vrot.slane %v853, %v861
    %v863 = vlaneseq
    %v864 = vshrl.u32 %v863, 7
    %v865 = vsub.s32 2, %v864
    %v866 = vrot.slane %v853, %v865
    %v902 = vunpack.c.l.b16 %v821
    %v903 = vunpack.c.h.b16 %v821
    %v904 = vunpack.c.l.b16 %v822
    %v905 = vunpack.c.l.b16 %v823
    %v906 = vunpack.c.h.b16 %v823
    %v907 = vunpack.c.l.b16 %v824
    %v908 = vunpack.c.l.b16 %v825
    %v909 = vunpack.c.h.b16 %v825
    %v910 = vunpack.c.l.b16 %v826
    %v911 = vunpack.c.l.b16 %v827
    %v912 = vunpack.c.h.b16 %v827
    %v913 = vunpack.c.l.b16 %v828
    %v914 = vunpack.c.l.b16 %v829
    %v915 = vunpack.c.h.b16 %v829
    %v916 = vunpack.c.l.b16 %v830
    %v917 = vunpack.c.l.b16 %v831
    %v918 = vunpack.c.h.b16 %v831
    %v919 = vunpack.c.l.b16 %v832
    %v920 = vunpack.c.l.b16 %v833
    %v921 = vunpack.c.h.b16 %v833
    %v922 = vunpack.c.l.b16 %v834
    %v923 = vunpack.c.l.b16 %v835
    %v924 = vunpack.c.h.b16 %v835
    %v925 = vunpack.c.l.b16 %v836
    %v926 = vunpack.c.l.b16 %v837
    %v927 = vunpack.c.h.b16 %v837
    %v928 = vunpack.c.l.b16 %v838
    %v929 = vunpack.c.l.b16 %v839
    %v930 = vunpack.c.h.b16 %v839
    %v931 = vunpack.c.l.b16 %v840
    %v932 = vunpack.c.l.b16 %v841
    %v933 = vunpack.c.h.b16 %v841
    %v934 = vunpack.c.l.b16 %v842
    %v935 = vunpack.c.l.b16 %v843
    %v936 = vunpack.c.h.b16 %v843
    %v937 = vunpack.c.l.b16 %v844
    %v938 = vunpack.c.l.b16 %v845
    %v939 = vunpack.c.h.b16 %v845
    %v940 = vunpack.c.l.b16 %v846
    %v941 = vunpack.c.l.b16 %v847
    %v942 = vunpack.c.h.b16 %v847
    %v943 = vunpack.c.l.b16 %v848
    %v944 = vunpack.c.l.b16 %v849
    %v945 = vunpack.c.h.b16 %v849
    %v946 = vunpack.c.l.b16 %v850
    %v947 = vunpack.c.l.b16 %v851
    %v948 = vunpack.c.h.b16 %v851
    %v949 = vunpack.c.l.b16 %v852
    %v950 = vpack.c.b16 %v905, %v902
    %v951 = vpack.c.b16 %v906, %v903
    %v952 = vpack.c.b16 %v907, %v904
    %v953 = vpack.c.b16 %v911, %v908
    %v954 = vpack.c.b16 %v912, %v909
    %v955 = vpack.c.b16 %v913, %v910
    %v956 = vpack.c.b16 %v917, %v914
    %v957 = vpack.c.b16 %v918, %v915
    %v958 = vpack.c.b16 %v919, %v916
    %v959 = vpack.c.b16 %v923, %v920
    %v960 = vpack.c.b16 %v924, %v921
    %v961 = vpack.c.b16 %v925, %v922
    %v962 = vpack.c.b16 %v929, %v926
    %v963 = vpack.c.b16 %v930, %v927
    %v964 = vpack.c.b16 %v931, %v928
    %v965 = vpack.c.b16 %v935, %v932
    %v966 = vpack.c.b16 %v936, %v933
    %v967 = vpack.c.b16 %v937, %v934
    %v968 = vpack.c.b16 %v941, %v938
    %v969 = vpack.c.b16 %v942, %v939
    %v970 = vpack.c.b16 %v943, %v940
    %v971 = vpack.c.b16 %v947, %v944
    %v972 = vpack.c.b16 %v948, %v945
    %v973 = vpack.c.b16 %v949, %v946
    %998 = vmatprep.subr.bf16.mxu0 %v951
    %999 = vmatpush1.bf16.msra.mxu0 %v950
    %1000 = vmatprep.subr.bf16.mxu0 %v954
    %1001 = vmatpush1.bf16.msra.mxu0 %v953
    %1002 = vmatprep.subr.bf16.mxu0 %v957
    %1003 = vmatpush1.bf16.msra.mxu0 %v956
    %1004 = vmatprep.subr.bf16.mxu0 %v960
    %1005 = vmatpush1.bf16.msra.mxu0 %v959
    %1006 = vmatprep.subr.bf16.mxu0 %v963
    %1007 = vmatpush1.bf16.msra.mxu0 %v962
    %1008 = vmatprep.subr.bf16.mxu0 %v966
    %1009 = vmatpush1.bf16.msra.mxu0 %v965
    %1010 = vmatprep.subr.bf16.mxu0 %v969
    %1011 = vmatpush1.bf16.msra.mxu0 %v968
    %1012 = vmatprep.subr.bf16.mxu0 %v972
    %1013 = vmatpush1.bf16.msra.mxu0 %v971
    %1014 = vmatprep.subr.bf16.mxu0 0
    %1015 = vmatpush1.bf16.msra.mxu0 0
    %1016 = vmatprep.subr.bf16.mxu0 0
    %1017 = vmatpush1.bf16.msra.mxu0 0
    %1018 = vmatprep.subr.bf16.mxu0 0
    %1019 = vmatpush1.bf16.msra.mxu0 0
    %1020 = vmatprep.subr.bf16.mxu0 0
    %1021 = vmatpush1.bf16.msra.mxu0 0
    %1022 = vmatprep.subr.bf16.mxu0 0
    %1023 = vmatpush1.bf16.msra.mxu0 0
    %1024 = vmatprep.subr.bf16.mxu0 0
    %1025 = vmatpush1.bf16.msra.mxu0 0
    %1026 = vmatprep.subr.bf16.mxu0 0
    %1027 = vmatpush1.bf16.msra.mxu0 0
    %1028 = vmatprep.subr.bf16.mxu0 0
    %1029 = vmatpush1.bf16.msra.mxu0 0
    %1030 = vmatprep.mubr.bf16.mxu0 0
    %1031 = vmatmul.mubr.bf16.gmra.mrb[0].mxu0 %v75
    %v1032 = vpop.f32.mrb[0].mxu0
    %v1033 = vadd.f32 %v858, %v1032
    %v1034 = vpop.f32.mrb[0].mxu0
    %v1035 = vadd.f32 %v862, %v1034
    %v1036 = vpop.f32.mrb[0].mxu0
    %v1037 = vpop.f32.mrb[0].mxu0
    %1038 = vdwg.mxu0
    %1039 = vmatprep.subr.bf16.mxu0 0
    %1040 = vmatpush1.bf16.msra.mxu0 %v952
    %1041 = vmatprep.subr.bf16.mxu0 0
    %1042 = vmatpush1.bf16.msra.mxu0 %v955
    %1043 = vmatprep.subr.bf16.mxu0 0
    %1044 = vmatpush1.bf16.msra.mxu0 %v958
    %1045 = vmatprep.subr.bf16.mxu0 0
    %1046 = vmatpush1.bf16.msra.mxu0 %v961
    %1047 = vmatprep.subr.bf16.mxu0 0
    %1048 = vmatpush1.bf16.msra.mxu0 %v964
    %1049 = vmatprep.subr.bf16.mxu0 0
    %1050 = vmatpush1.bf16.msra.mxu0 %v967
    %1051 = vmatprep.subr.bf16.mxu0 0
    %1052 = vmatpush1.bf16.msra.mxu0 %v970
    %1053 = vmatprep.subr.bf16.mxu0 0
    %1054 = vmatpush1.bf16.msra.mxu0 %v973
    %1055 = vmatprep.subr.bf16.mxu0 0
    %1056 = vmatpush1.bf16.msra.mxu0 0
    %1057 = vmatprep.subr.bf16.mxu0 0
    %1058 = vmatpush1.bf16.msra.mxu0 0
    %1059 = vmatprep.subr.bf16.mxu0 0
    %1060 = vmatpush1.bf16.msra.mxu0 0
    %1061 = vmatprep.subr.bf16.mxu0 0
    %1062 = vmatpush1.bf16.msra.mxu0 0
    %1063 = vmatprep.subr.bf16.mxu0 0
    %1064 = vmatpush1.bf16.msra.mxu0 0
    %1065 = vmatprep.subr.bf16.mxu0 0
    %1066 = vmatpush1.bf16.msra.mxu0 0
    %1067 = vmatprep.subr.bf16.mxu0 0
    %1068 = vmatpush1.bf16.msra.mxu0 0
    %1069 = vmatprep.subr.bf16.mxu0 0
    %1070 = vmatpush1.bf16.msra.mxu0 0
    %1071 = vmatprep.mubr.bf16.mxu0 0
    %1072 = vmatmul.mubr.bf16.gmra.mrb[0].mxu0 %v75
    %v1073 = vpop.f32.mrb[0].mxu0
    %v1074 = vadd.f32 %v866, %v1073
    %v1075 = vpop.f32.mrb[0].mxu0
    %v1076 = vpop.f32.mrb[0].mxu0
    %v1077 = vpop.f32.mrb[0].mxu0
    %1078 = vdwg.mxu0
    %v1079 = vadd.f32 %v818, %v1033
    %v1080 = vxor.u32 %v1079, 2147483648
    %v1081 = vmul.f32 %v1080, 1.442695
    %v1082 = vpow.pop %v1081
    %v1083 = vadd.f32 %v1082, 1.0
    %v1084 = vrcp.pop %v1083
    %v1085 = vmul.f32 1.0, %v1084
    %v1086 = vadd.f32 %v819, %v1035
    %v1087 = vxor.u32 %v1086, 2147483648
    %v1088 = vmul.f32 %v1087, 1.442695
    %v1089 = vpow.pop %v1088
    %v1090 = vadd.f32 %v1089, 1.0
    %v1091 = vrcp.pop %v1090
    %v1092 = vmul.f32 1.0, %v1091
    %v1093 = vmul.f32 %v1085, %v1074
    %v1094 = vadd.f32 %v820, %v1093
    %v1095 = vtanh.pop %v1094
    %v1096 = vsub.f32 1.0, %v1092
    %v1097 = vmul.f32 %v1096, %v1095
    %v1098 = vmul.f32 %v1092, %v73
    %v1099 = vadd.f32 %v1097, %v1098
    %v1100 = vpack.c.bf16 %v1099, %v1099
    %v1101 = vld [vmem:[%s12] sm:$0xf]
    %v1102 = vld [vmem:[%s12 + $0x4] sm:$0xf]
    %v1103 = vld [vmem:[%s12 + $0x8] sm:$0xf]
    %v1104 = vld [vmem:[%s12 + $0xc] sm:$0xf]
    %v1105 = vld [vmem:[%s12 + $0x10] sm:$0xf]
    %v1106 = vld [vmem:[%s12 + $0x14] sm:$0xf]
    %v1107 = vld [vmem:[%s12 + $0x18] sm:$0xf]
    %v1108 = vld [vmem:[%s12 + $0x1c] sm:$0xf]
    %v1109 = vld [vmem:[%s12 + $0x20] sm:$0xf]
    %v1110 = vld [vmem:[%s12 + $0x24] sm:$0xf]
    %v1111 = vld [vmem:[%s12 + $0x28] sm:$0xf]
    %v1112 = vld [vmem:[%s12 + $0x2c] sm:$0xf]
    %v1113 = vld [vmem:[%s12 + $0x30] sm:$0xf]
    %v1114 = vld [vmem:[%s12 + $0x34] sm:$0xf]
    %v1115 = vld [vmem:[%s12 + $0x38] sm:$0xf]
    %v1116 = vld [vmem:[%s12 + $0x3c] sm:$0xf]
    %v1117 = vld [vmem:[%s13] sm:$0x1]
    %v1119 = vlaneseq
    %v1120 = vshrl.u32 %v1119, 7
    %v1121 = vsub.s32 0, %v1120
    %v1122 = vrot.slane %v1117, %v1121
    %v1140 = vunpack.c.l.b16 %v1101
    %v1141 = vunpack.c.l.b16 %v1102
    %v1142 = vunpack.c.l.b16 %v1103
    %v1143 = vunpack.c.l.b16 %v1104
    %v1144 = vunpack.c.l.b16 %v1105
    %v1145 = vunpack.c.l.b16 %v1106
    %v1146 = vunpack.c.l.b16 %v1107
    %v1147 = vunpack.c.l.b16 %v1108
    %v1148 = vunpack.c.l.b16 %v1109
    %v1149 = vunpack.c.l.b16 %v1110
    %v1150 = vunpack.c.l.b16 %v1111
    %v1151 = vunpack.c.l.b16 %v1112
    %v1152 = vunpack.c.l.b16 %v1113
    %v1153 = vunpack.c.l.b16 %v1114
    %v1154 = vunpack.c.l.b16 %v1115
    %v1155 = vunpack.c.l.b16 %v1116
    %v1156 = vpack.c.b16 %v1141, %v1140
    %v1157 = vpack.c.b16 %v1143, %v1142
    %v1158 = vpack.c.b16 %v1145, %v1144
    %v1159 = vpack.c.b16 %v1147, %v1146
    %v1160 = vpack.c.b16 %v1149, %v1148
    %v1161 = vpack.c.b16 %v1151, %v1150
    %v1162 = vpack.c.b16 %v1153, %v1152
    %v1163 = vpack.c.b16 %v1155, %v1154
    %1172 = vmatprep.subr.bf16.mxu0 0
    %1173 = vmatpush1.bf16.msra.mxu0 %v1156
    %1174 = vmatprep.subr.bf16.mxu0 0
    %1175 = vmatpush1.bf16.msra.mxu0 %v1157
    %1176 = vmatprep.subr.bf16.mxu0 0
    %1177 = vmatpush1.bf16.msra.mxu0 %v1158
    %1178 = vmatprep.subr.bf16.mxu0 0
    %1179 = vmatpush1.bf16.msra.mxu0 %v1159
    %1180 = vmatprep.subr.bf16.mxu0 0
    %1181 = vmatpush1.bf16.msra.mxu0 %v1160
    %1182 = vmatprep.subr.bf16.mxu0 0
    %1183 = vmatpush1.bf16.msra.mxu0 %v1161
    %1184 = vmatprep.subr.bf16.mxu0 0
    %1185 = vmatpush1.bf16.msra.mxu0 %v1162
    %1186 = vmatprep.subr.bf16.mxu0 0
    %1187 = vmatpush1.bf16.msra.mxu0 %v1163
    %1188 = vmatprep.subr.bf16.mxu0 0
    %1189 = vmatpush1.bf16.msra.mxu0 0
    %1190 = vmatprep.subr.bf16.mxu0 0
    %1191 = vmatpush1.bf16.msra.mxu0 0
    %1192 = vmatprep.subr.bf16.mxu0 0
    %1193 = vmatpush1.bf16.msra.mxu0 0
    %1194 = vmatprep.subr.bf16.mxu0 0
    %1195 = vmatpush1.bf16.msra.mxu0 0
    %1196 = vmatprep.subr.bf16.mxu0 0
    %1197 = vmatpush1.bf16.msra.mxu0 0
    %1198 = vmatprep.subr.bf16.mxu0 0
    %1199 = vmatpush1.bf16.msra.mxu0 0
    %1200 = vmatprep.subr.bf16.mxu0 0
    %1201 = vmatpush1.bf16.msra.mxu0 0
    %1202 = vmatprep.subr.bf16.mxu0 0
    %1203 = vmatpush1.bf16.msra.mxu0 0
    %1204 = vmatprep.mubr.bf16.mxu0 0
    %1205 = vmatmul.mubr.bf16.gmra.mrb[0].mxu0 %v1100
    %v1206 = vpop.f32.mrb[0].mxu0
    %v1207 = vadd.f32 %v1122, %v1206
    %v1208 = vpop.f32.mrb[0].mxu0
    %v1209 = vpop.f32.mrb[0].mxu0
    %v1210 = vpop.f32.mrb[0].mxu0
    %1211 = vdwg.mxu0
    %vm1212 = vcmp.lt.s32.totalorder %v66, 16
    %v1213 = vsel %vm1212, %v1207, -1e+30
    %vm1214 = vcmask 1041408
    %v1215 = vsel %vm1214, %v1213, -inf
    %1216 = vmax.xlane.f32.xlu0 %v1215
    %v1217 = vpop.xlane.xlu0 %1216
    %v1218 = vsub.f32 %v1213, %v1217
    %v1219 = vmul.f32 %v1218, 1.442695
    %v1220 = vpow.pop %v1219
    %v1221 = vsel %vm1214, %v1220, 0.0
    %1222 = vadd.xlane.f32.xlu0 %v1221
    %v1223 = vpop.xlane.xlu0 %1222
    %v1224 = vlog2.pop %v1223
    %v1225 = vmul.f32 %v1224, 0.6931472
    %v1226 = vadd.f32 %v1217, %v1225
    %v1227 = vsub.f32 %v1213, %v1226
    %1228 = vset.pattern.permute.xlu0 0
    %1229 = vperm.xlu0 %1228, %v80
    %v1230 = vpop.permute.xlu0 %1229
    %vm1231 = vcmp.eq.s32.totalorder %v66, %v1230
    %v1232 = vsel %vm1231, 1, 0
    %v1233 = vcvt.s32.f32 %v1232
    %v1234 = vmul.f32 %v1227, %v1233
    %v1235 = vsel %vm1214, %v1234, 0.0
    %1236 = vadd.xlane.f32.xlu0 %v1235
    %v1237 = vpop.xlane.xlu0 %1236
    %v1238 = vstv %s68
    %vm1239 = vcmp.lt.s32.totalorder %v1238, %v64
    %v1240 = vsel %vm1239, 1, 0
    %v1241 = vcvt.s32.f32 %v1240
    %v1242 = vmul.f32 %v1237, %v1241
    %v1243 = vsub.f32 %v74, %v1242
  $region62: #{model_forward.3} parent=0 // loop_footer
    %s72 = sadd.s32 1, %s68
  $region63: #{model_forward.3} parent=0 // loop_footer_branch
    %67 = sbr.rel target = $region59
  $region64: #{model_forward.3} parent=0 // loop_exit
    _
  %vm1244 = vcmask 1024
  %v1245 = vsel %vm1244, %v74, 0.0
  %v1246 = vrot.slane %v1245, 4
  %v1247 = vadd.f32 %v1245, %v1246
  %v1248 = vrot.slane %v1247, 2
  %v1249 = vadd.f32 %v1247, %v1248
  %v1250 = vrot.slane %v1249, 1
  %v1251 = vadd.f32 %v1249, %v1250
  %v1252 = vmul.f32 %v1251, 0.5
  %1254 = vset.pattern.permute.xlu0 0
  %1255 = vperm.xlu0 %1254, %v1252
  %v1256 = vpop.permute.xlu0 %1255
  %1258 = vst [vmem:[%s14] sm:$0xff] %v1256
  // Predicated region
  $region65: #{model_forward.3} parent=0 // pred_check
    _
  $region66: #{model_forward.3} parent=0 // pred_check_branch
    %1260 = sbr.rel (0) target = $region68
  $region67: #{model_forward.3} parent=0 // pred_region
    _
  $region68: #{model_forward.3} parent=0 // pred_fallthru
    _
  // Predicated region
  $region69: #{model_forward.3} parent=0 // pred_check
    _
  $region70: #{model_forward.3} parent=0 // pred_check_branch
    %1262 = sbr.rel (0) target = $region72
  $region71: #{model_forward.3} parent=0 // pred_region
    _
  $region72: #{model_forward.3} parent=0 // pred_fallthru
    _

</llo_original>
